<compile_context>
chip_gen: v7x
topology: tpu7x:2x2x1
jax: 0.10.0
libtpu: 0.0.40
codegen_flags: <defaults>
</compile_context>

<pallas_src>
import functools

import jax
import jax.numpy as jnp
from jax.experimental import pallas as pl
from jax.experimental.pallas import tpu as pltpu

BN_EPS = 1e-5
GIN_EPS = 0.0  # GINConv default (train_eps=False, eps=0)

# Above v5e's 16 MiB default scoped limit, safely below every gen's physical VMEM.
_VMEM_LIMIT = 32 * 1024 * 1024


def _round_up(x, m):
    return (x + m - 1) // m * m


def _pad_dim(d):
    # v6e/v7x MXU is 256-wide: dims that already have >128 real elements get
    # padded to multiples of 256 so each MXU pass is full width; small demo
    # dims stay at the 128-lane minimum (pure padding waste otherwise).
    return _round_up(d, 256 if d > 128 else 128)


def _pick_tile(n, candidates):
    for c in candidates:
        if n % c == 0:
            return c
    return n  # n is always a multiple of 128 here


# ---------------------------------------------------------------------------
# Kernel 1: one GIN layer.
#   grid = (row blocks [parallel], K blocks [arbitrary])
#   A' @ x aggregation accumulates in f32 VMEM scratch; fused MLP on finalize.
# ---------------------------------------------------------------------------
def gin_layer_kernel(x_ref, adj_ref, w1_ref, b1_ref, w2_ref, b2_ref, mask_ref,
                     out_ref, acc_ref, *, tk, relu_out):
    k = pl.program_id(1)

    @pl.when(k == 0)
    def _():
        acc_ref[...] = jnp.zeros_like(acc_ref)

    # GIN aggregation: (1+eps)*x_i + sum_{j in N(i)} x_j  ==  A' @ x
    # adjacency streams in (tm, tk) bf16 tiles; x stays full-K VMEM resident.
    start = pl.multiple_of(k * tk, tk)
    acc_ref[...] += jnp.dot(adj_ref[...], x_ref[pl.ds(start, tk), :],
                            preferred_element_type=jnp.float32)

    @pl.when(k == pl.num_programs(1) - 1)
    def _():
        # inner MLP linear 1 (inner BatchNorm1d folded into w1/b1) + ReLU
        h = jnp.dot(acc_ref[...].astype(jnp.bfloat16), w1_ref[...],
                    preferred_element_type=jnp.float32) + b1_ref[...]
        h = jnp.maximum(h, 0.0)
        # inner MLP linear 2 (outer BatchNorm1d folded into w2/b2 if not last)
        h = jnp.dot(h.astype(jnp.bfloat16), w2_ref[...],
                    preferred_element_type=jnp.float32) + b2_ref[...]
        if relu_out:
            h = jnp.maximum(h, 0.0)   # ReLU after outer BN; dropout = id (eval)
        # padded (fake) node rows forced to exactly zero (guard against leaks)
        out_ref[...] = (h * mask_ref[...]).astype(out_ref.dtype)


def gin_layer_call(x, adj, lw, mask, *, relu_out):
    np_, hp = x.shape
    tm = _pick_tile(np_, (256, 128))
    tk = _pick_tile(np_, (512, 256, 128))
    grid = (np_ // tm, np_ // tk)

    adj_kwargs = {}
    if grid[1] >= 3:
        # deeper pipelining on the HBM-bound adjacency stream (helps v5e most)
        adj_kwargs["pipeline_mode"] = pl.Buffered(3)

    cost = pl.CostEstimate(
        flops=2 * np_ * np_ * hp + 4 * np_ * hp * hp,
        transcendentals=0,
        bytes_accessed=(np_ * np_ * 2 + 2 * np_ * hp * 2
                        + 2 * hp * hp * 2 + 2 * hp * 4 + np_ * 4),
    )
    kernel = functools.partial(gin_layer_kernel, tk=tk, relu_out=relu_out)
    return pl.pallas_call(
        kernel,
        out_shape=jax.ShapeDtypeStruct((np_, hp), jnp.bfloat16),
        grid_spec=pltpu.PrefetchScalarGridSpec(
            num_scalar_prefetch=0,
            grid=grid,
            in_specs=[
                pl.BlockSpec((np_, hp), lambda i, k: (0, 0)),            # x (resident)
                pl.BlockSpec((tm, tk), lambda i, k: (i, k), **adj_kwargs),
                pl.BlockSpec((hp, hp), lambda i, k: (0, 0)),             # w1
                pl.BlockSpec((1, hp), lambda i, k: (0, 0)),              # b1
                pl.BlockSpec((hp, hp), lambda i, k: (0, 0)),             # w2
                pl.BlockSpec((1, hp), lambda i, k: (0, 0)),              # b2
                pl.BlockSpec((tm, 1), lambda i, k: (i, 0)),              # row mask
            ],
            out_specs=pl.BlockSpec((tm, hp), lambda i, k: (i, 0)),
            scratch_shapes=[pltpu.VMEM((tm, hp), jnp.float32)],
        ),
        compiler_params=pltpu.CompilerParams(
            dimension_semantics=("parallel", "arbitrary"),
            vmem_limit_bytes=_VMEM_LIMIT),
        cost_estimate=cost,
    )(x, adj, lw["w1"], lw["b1"], lw["w2"], lw["b2"], mask)


# ---------------------------------------------------------------------------
# Kernel 2: global_add_pool (K-tiled P @ x) + MLP head (Linear->ReLU->Linear).
# ---------------------------------------------------------------------------
def pool_head_kernel(pool_ref, x_ref, wh_ref, bh_ref, wo_ref, bo_ref,
                     out_ref, acc_ref):
    k = pl.program_id(0)

    @pl.when(k == 0)
    def _():
        acc_ref[...] = jnp.zeros_like(acc_ref)

    # global_add_pool as a dense matmul P @ x (P is 0/1, exact in bf16)
    acc_ref[...] += jnp.dot(pool_ref[...], x_ref[...],
                            preferred_element_type=jnp.float32)

    @pl.when(k == pl.num_programs(0) - 1)
    def _():
        # head: Linear -> ReLU -> Linear (dropout = identity in eval mode)
        h = jnp.dot(acc_ref[...].astype(jnp.bfloat16), wh_ref[...],
                    preferred_element_type=jnp.float32) + bh_ref[...]
        h = jnp.maximum(h, 0.0)
        out_ref[...] = jnp.dot(h.astype(jnp.bfloat16), wo_ref[...],
                               preferred_element_type=jnp.float32) + bo_ref[...]


def pool_head_call(pool, x, head):
    gp, np_ = pool.shape
    hp = x.shape[1]
    op = head["wo"].shape[1]
    tk = _pick_tile(np_, (512, 256, 128))
    grid = (np_ // tk,)
    cost = pl.CostEstimate(
        flops=2 * gp * np_ * hp + 2 * gp * hp * hp + 2 * gp * hp * op,
        transcendentals=0,
        bytes_accessed=(gp * np_ * 2 + np_ * hp * 2 + hp * hp * 2
                        + hp * op * 2 + gp * op * 4),
    )
    return pl.pallas_call(
        pool_head_kernel,
        out_shape=jax.ShapeDtypeStruct((gp, op), jnp.float32),
        grid_spec=pltpu.PrefetchScalarGridSpec(
            num_scalar_prefetch=0,
            grid=grid,
            in_specs=[
                pl.BlockSpec((gp, tk), lambda k: (0, k)),   # pooling matrix
                pl.BlockSpec((tk, hp), lambda k: (k, 0)),   # last-layer x
                pl.BlockSpec((hp, hp), lambda k: (0, 0)),   # wh
                pl.BlockSpec((1, hp), lambda k: (0, 0)),    # bh
                pl.BlockSpec((hp, op), lambda k: (0, 0)),   # wo
                pl.BlockSpec((1, op), lambda k: (0, 0)),    # bo
            ],
            out_specs=pl.BlockSpec((gp, op), lambda k: (0, 0)),
            scratch_shapes=[pltpu.VMEM((gp, hp), jnp.float32)],
        ),
        compiler_params=pltpu.CompilerParams(
            dimension_semantics=("arbitrary",),
            vmem_limit_bytes=_VMEM_LIMIT),
        cost_estimate=cost,
    )(pool, x, head["wh"], head["bh"], head["wo"], head["bo"])


# ---------------------------------------------------------------------------
# Host-side parameter folding / padding
# ---------------------------------------------------------------------------
def _pad2(a, rows, cols, dtype=jnp.float32):
    out = jnp.zeros((rows, cols), jnp.float32)
    out = out.at[:a.shape[0], :a.shape[1]].set(a.astype(jnp.float32))
    return out.astype(dtype)


def _fold_params(params, hp, op):
    """Fold eval BatchNorms into linears, zero-pad to kernel shapes."""
    num_layers = len(params["layers"])
    layers = []
    for idx, lp in enumerate(params["layers"]):
        s1 = lp["bn1_g"] / jnp.sqrt(lp["bn1_rv"] + BN_EPS)            # [1, H]
        w1 = lp["w1"] * s1
        b1 = (lp["b1"] - lp["bn1_rm"]) * s1 + lp["bn1_b"]
        if idx < num_layers - 1:                                      # outer BN
            so = lp["obn_g"] / jnp.sqrt(lp["obn_rv"] + BN_EPS)
            w2 = lp["w2"] * so
            b2 = (lp["b2"] - lp["obn_rm"]) * so + lp["obn_b"]
        else:                                                         # last: no BN
            w2, b2 = lp["w2"], lp["b2"]
        layers.append({
            "w1": _pad2(w1, hp, hp, jnp.bfloat16),
            "b1": _pad2(b1, 1, hp),
            "w2": _pad2(w2, hp, hp, jnp.bfloat16),
            "b2": _pad2(b2, 1, hp),
        })
    h = params["head"]
    head = {
        "wh": _pad2(h["wh"], hp, hp, jnp.bfloat16),
        "bh": _pad2(h["bh"], 1, hp),
        "wo": _pad2(h["wo"], hp, op, jnp.bfloat16),
        "bo": _pad2(h["bo"], 1, op),
    }
    return layers, head


# ---------------------------------------------------------------------------
# Forward pass (AtomEncoder / adjacency / pooling-matrix glue in plain JAX)
# ---------------------------------------------------------------------------
@functools.partial(jax.jit, static_argnames=("num_graphs",))
def gin_forward(node_feats, edge_index, batch, params, num_graphs):
    n = node_feats.shape[0]
    hidden = params["atom_emb"].shape[-1]
    out_dim = params["head"]["wo"].shape[1]
    num_layers = len(params["layers"])

    np_ = _pad_dim(n)               # node / contraction dim (lane-dense)
    hp = _pad_dim(hidden)           # hidden dim (lane-dense)
    gp = _round_up(num_graphs, 8)   # sublane-aligned graph count
    op = _pad_dim(out_dim)          # lane-dense output stores

    # --- AtomEncoder: sum of per-feature embedding lookups (gather glue) ---
    emb = params["atom_emb"]                      # [F, V, H]
    x = jnp.zeros((n, hidden), jnp.float32)
    for f in range(node_feats.shape[1]):
        x = x + emb[f][node_feats[:, f]]
    # bf16 carry: activations travel between layer kernels in bf16
    x0 = jnp.zeros((np_, hp), jnp.bfloat16).at[:n, :hidden].set(
        x.astype(jnp.bfloat16))

    # --- dense bf16 adjacency A[i,j] = #edges j->i, (1+eps)*I folded in ---
    # (built directly in bf16: no f32 Np^2 intermediate, no eye materialization)
    src, dst = edge_index[0], edge_index[1]
    adj = jnp.zeros((np_, np_), jnp.bfloat16)
    adj = adj.at[dst, src].add(jnp.ones_like(dst, dtype=jnp.bfloat16))
    diag = jnp.arange(n, dtype=jnp.int32)
    adj = adj.at[diag, diag].add(jnp.full((n,), 1.0 + GIN_EPS, jnp.bfloat16))

    # --- pooling matrix P[g, i] = 1 iff node i belongs to graph g (bf16) ---
    batch_p = jnp.full((np_,), -1, jnp.int32).at[:n].set(batch)
    pool = (jnp.arange(gp, dtype=jnp.int32)[:, None] == batch_p[None, :]
            ).astype(jnp.bfloat16)

    # --- real-node row mask: padded rows stay exactly zero every layer ---
    mask = (jnp.arange(np_) < n).astype(jnp.float32)[:, None]        # [Np, 1]

    layers, head = _fold_params(params, hp, op)

    x = x0
    for idx in range(num_layers):
        x = gin_layer_call(x, adj, layers[idx], mask,
                           relu_out=(idx < num_layers - 1))
    out = pool_head_call(pool, x, head)
    return out[:num_graphs, :out_dim]


# ---------------------------------------------------------------------------
# Deterministic parameter construction (torch-equivalent layout, w as [in,out])
# ---------------------------------------------------------------------------
def make_params(key, hidden_dim, output_dim, num_layers, num_feats, vocab):
    keys = iter(jax.random.split(key, 12 * num_layers + 16))

    def dense(shape, scale=0.1):
        return scale * jax.random.normal(next(keys), shape, jnp.float32)

    params = {
        "atom_emb": dense((num_feats, vocab, hidden_dim), 0.2),
        "layers": [],
        "head": {
            "wh": dense((hidden_dim, hidden_dim)),
            "bh": dense((1, hidden_dim)),
            "wo": dense((hidden_dim, output_dim)),
            "bo": dense((1, output_dim)),
        },
    }
    for idx in range(num_layers):
        lp = {
            "w1": dense((hidden_dim, hidden_dim)),
            "b1": dense((1, hidden_dim)),
            "bn1_g": 1.0 + dense((1, hidden_dim)),
            "bn1_b": dense((1, hidden_dim)),
            "bn1_rm": dense((1, hidden_dim)),
            "bn1_rv": 0.5 + jnp.abs(dense((1, hidden_dim))),
            "w2": dense((hidden_dim, hidden_dim)),
            "b2": dense((1, hidden_dim)),
        }
        if idx < num_layers - 1:  # outer BatchNorm only between layers
            lp.update({
                "obn_g": 1.0 + dense((1, hidden_dim)),
                "obn_b": dense((1, hidden_dim)),
                "obn_rm": dense((1, hidden_dim)),
                "obn_rv": 0.5 + jnp.abs(dense((1, hidden_dim))),
            })
        params["layers"].append(lp)
    return params


# ---------------------------------------------------------------------------
# Main
# ---------------------------------------------------------------------------
if __name__ == "__main__":
    N, H, G, OUT_DIM, NUM_LAYERS = 32, 32, 2, 8, 3
    NUM_FEATS, VOCAB = 3, 10

    key = jax.random.PRNGKey(0)
    k_feat, k_param = jax.random.split(key)

    # integer atom features for the AtomEncoder
    node_feats = jax.random.randint(k_feat, (N, NUM_FEATS), 0, VOCAB, jnp.int32)

    # two graphs of 16 nodes each; bidirectional ring edges inside each graph
    src, dst = [], []
    nodes_per_graph = N // G
    for g in range(G):
        base = g * nodes_per_graph
        for i in range(nodes_per_graph):
            a, b = base + i, base + (i + 1) % nodes_per_graph
            src += [a, b]
            dst += [b, a]
    edge_index = jnp.array([src, dst], dtype=jnp.int32)                  # [2, 64]
    batch = jnp.repeat(jnp.arange(G, dtype=jnp.int32), nodes_per_graph)  # [32]

    params = make_params(k_param, H, OUT_DIM, NUM_LAYERS, NUM_FEATS, VOCAB)

    out = gin_forward(node_feats, edge_index, batch, params, num_graphs=G)
    out = jax.block_until_ready(out)
    assert out.shape == (G, OUT_DIM) and out.dtype == jnp.float32
    assert bool(jnp.all(jnp.isfinite(out)))
    print("KERNEL_OK")
</pallas_src>

<mosaic_0001>
module attributes {stable_mosaic.version = 11 : i64} {
  func.func @gin_layer_kernel(%arg0: i32, %arg1: i32, %arg2: memref<128x128xbf16, #tpu.memory_space<vmem>>, %arg3: memref<128x128xbf16, #tpu.memory_space<vmem>>, %arg4: memref<128x128xbf16, #tpu.memory_space<vmem>>, %arg5: memref<1x128xf32, #tpu.memory_space<vmem>>, %arg6: memref<128x128xbf16, #tpu.memory_space<vmem>>, %arg7: memref<1x128xf32, #tpu.memory_space<vmem>>, %arg8: memref<128x1xf32, #tpu.memory_space<vmem>>, %arg9: memref<128x128xbf16, #tpu.memory_space<vmem>>, %arg10: memref<128x128xf32, #tpu.memory_space<vmem>>) attributes {dimension_semantics = [#tpu.dimension_semantics<parallel>, #tpu.dimension_semantics<arbitrary>], iteration_bounds = array<i64: 1, 1>, scalar_prefetch = 0 : i64, scratch_operands = 1 : i64, tpu.core_type = #tpu.core_type<tc>, window_params = [{pipeline_mode = #tpu.pipeline_mode<synchronous>, transform_indices = @transform_0, window_bounds = array<i64: 128, 128>}, {transform_indices = @transform_1, window_bounds = array<i64: 128, 128>}, {pipeline_mode = #tpu.pipeline_mode<synchronous>, transform_indices = @transform_2, window_bounds = array<i64: 128, 128>}, {pipeline_mode = #tpu.pipeline_mode<synchronous>, transform_indices = @transform_3, window_bounds = array<i64: 1, 128>}, {pipeline_mode = #tpu.pipeline_mode<synchronous>, transform_indices = @transform_4, window_bounds = array<i64: 128, 128>}, {pipeline_mode = #tpu.pipeline_mode<synchronous>, transform_indices = @transform_5, window_bounds = array<i64: 1, 128>}, {transform_indices = @transform_6, window_bounds = array<i64: 128, 1>}, {transform_indices = @transform_7, window_bounds = array<i64: 128, 128>}]} {
    %c0_i32 = arith.constant 0 : i32
    %0 = arith.cmpi eq, %arg1, %c0_i32 : i32
    %1 = arith.extui %0 : i1 to i32
    %c0_i32_0 = arith.constant 0 : i32
    %2 = arith.cmpi ne, %1, %c0_i32_0 : i32
    scf.if %2 {
      %cst_9 = arith.constant 0.000000e+00 : f32
      %15 = vector.broadcast %cst_9 : f32 to vector<128x128xf32>
      %c0_10 = arith.constant 0 : index
      %c0_11 = arith.constant 0 : index
      %16 = vector.load %arg10[%c0_10, %c0_11] : memref<128x128xf32, #tpu.memory_space<vmem>>, vector<128x128xf32>
      tpu.vector_store %arg10[%c0_10, %c0_11], %15 {strides = array<i32>} : memref<128x128xf32, #tpu.memory_space<vmem>>, vector<128x128xf32>,
    } else {
    }
    %c128_i32 = arith.constant 128 : i32
    %3 = arith.muli %arg1, %c128_i32 : i32
    %4 = tpu.assume_multiple %3, 128 : i32
    %c0 = arith.constant 0 : index
    %c0_1 = arith.constant 0 : index
    %5 = vector.load %arg10[%c0, %c0_1] : memref<128x128xf32, #tpu.memory_space<vmem>>, vector<128x128xf32>
    %c0_2 = arith.constant 0 : index
    %c0_3 = arith.constant 0 : index
    %6 = vector.load %arg3[%c0_2, %c0_3] : memref<128x128xbf16, #tpu.memory_space<vmem>>, vector<128x128xbf16>
    %7 = arith.index_cast %4 : i32 to index
    %c0_4 = arith.constant 0 : index
    %8 = vector.load %arg2[%7, %c0_4] : memref<128x128xbf16, #tpu.memory_space<vmem>>, vector<128x128xbf16>
    %cst = arith.constant dense<0.000000e+00> : vector<128x128xf32>
    %9 = tpu.matmul %6, %8, %cst {dimension_numbers = #tpu.dot_dimension_numbers<[1], [0], [0], [1], [0, 0, 1, 1], [], []>} : vector<128x128xbf16>, vector<128x128xbf16>, vector<128x128xf32> -> vector<128x128xf32>
    %10 = arith.addf %5, %9 : vector<128x128xf32>
    %c0_5 = arith.constant 0 : index
    %c0_6 = arith.constant 0 : index
    %11 = vector.load %arg10[%c0_5, %c0_6] : memref<128x128xf32, #tpu.memory_space<vmem>>, vector<128x128xf32>
    tpu.vector_store %arg10[%c0_5, %c0_6], %10 {strides = array<i32>} : memref<128x128xf32, #tpu.memory_space<vmem>>, vector<128x128xf32>,
    %c0_i32_7 = arith.constant 0 : i32
    %12 = arith.cmpi eq, %arg1, %c0_i32_7 : i32
    %13 = arith.extui %12 : i1 to i32
    %c0_i32_8 = arith.constant 0 : i32
    %14 = arith.cmpi ne, %13, %c0_i32_8 : i32
    scf.if %14 {
      %c0_9 = arith.constant 0 : index
      %c0_10 = arith.constant 0 : index
      %15 = vector.load %arg10[%c0_9, %c0_10] : memref<128x128xf32, #tpu.memory_space<vmem>>, vector<128x128xf32>
      %16 = arith.truncf %15 : vector<128x128xf32> to vector<128x128xbf16>
      %c0_11 = arith.constant 0 : index
      %c0_12 = arith.constant 0 : index
      %17 = vector.load %arg4[%c0_11, %c0_12] : memref<128x128xbf16, #tpu.memory_space<vmem>>, vector<128x128xbf16>
      %cst_13 = arith.constant dense<0.000000e+00> : vector<128x128xf32>
      %18 = tpu.matmul %16, %17, %cst_13 {dimension_numbers = #tpu.dot_dimension_numbers<[1], [0], [0], [1], [0, 0, 1, 1], [], []>} : vector<128x128xbf16>, vector<128x128xbf16>, vector<128x128xf32> -> vector<128x128xf32>
      %c0_14 = arith.constant 0 : index
      %c0_15 = arith.constant 0 : index
      %19 = vector.load %arg5[%c0_14, %c0_15] : memref<1x128xf32, #tpu.memory_space<vmem>>, vector<1x128xf32>
      %20 = vector.broadcast %19 : vector<1x128xf32> to vector<128x128xf32>
      %21 = arith.addf %18, %20 : vector<128x128xf32>
      %cst_16 = arith.constant 0.000000e+00 : f32
      %22 = vector.broadcast %cst_16 : f32 to vector<128x128xf32>
      %23 = arith.maximumf %21, %22 : vector<128x128xf32>
      %24 = arith.truncf %23 : vector<128x128xf32> to vector<128x128xbf16>
      %c0_17 = arith.constant 0 : index
      %c0_18 = arith.constant 0 : index
      %25 = vector.load %arg6[%c0_17, %c0_18] : memref<128x128xbf16, #tpu.memory_space<vmem>>, vector<128x128xbf16>
      %cst_19 = arith.constant dense<0.000000e+00> : vector<128x128xf32>
      %26 = tpu.matmul %24, %25, %cst_19 {dimension_numbers = #tpu.dot_dimension_numbers<[1], [0], [0], [1], [0, 0, 1, 1], [], []>} : vector<128x128xbf16>, vector<128x128xbf16>, vector<128x128xf32> -> vector<128x128xf32>
      %c0_20 = arith.constant 0 : index
      %c0_21 = arith.constant 0 : index
      %27 = vector.load %arg7[%c0_20, %c0_21] : memref<1x128xf32, #tpu.memory_space<vmem>>, vector<1x128xf32>
      %28 = vector.broadcast %27 : vector<1x128xf32> to vector<128x128xf32>
      %29 = arith.addf %26, %28 : vector<128x128xf32>
      %c0_22 = arith.constant 0 : index
      %c0_23 = arith.constant 0 : index
      %30 = vector.load %arg8[%c0_22, %c0_23] : memref<128x1xf32, #tpu.memory_space<vmem>>, vector<128x1xf32>
      %31 = vector.broadcast %30 : vector<128x1xf32> to vector<128x128xf32>
      %32 = arith.mulf %29, %31 : vector<128x128xf32>
      %33 = arith.truncf %32 : vector<128x128xf32> to vector<128x128xbf16>
      %c0_24 = arith.constant 0 : index
      %c0_25 = arith.constant 0 : index
      %34 = vector.load %arg9[%c0_24, %c0_25] : memref<128x128xbf16, #tpu.memory_space<vmem>>, vector<128x128xbf16>
      tpu.vector_store %arg9[%c0_24, %c0_25], %33 {strides = array<i32>} : memref<128x128xbf16, #tpu.memory_space<vmem>>, vector<128x128xbf16>,
    } else {
    }
    return
  }
  func.func @transform_0(%arg0: i32, %arg1: i32) -> (i32, i32) {
    %c0_i32 = arith.constant 0 : i32
    %c0_i32_0 = arith.constant 0 : i32
    %c0_i32_1 = arith.constant 0 : i32
    return %c0_i32, %c0_i32_0 : i32, i32
  }
  func.func @transform_1(%arg0: i32, %arg1: i32) -> (i32, i32) {
    %c0_i32 = arith.constant 0 : i32
    return %arg0, %arg1 : i32, i32
  }
  func.func @transform_2(%arg0: i32, %arg1: i32) -> (i32, i32) {
    %c0_i32 = arith.constant 0 : i32
    %c0_i32_0 = arith.constant 0 : i32
    %c0_i32_1 = arith.constant 0 : i32
    return %c0_i32, %c0_i32_0 : i32, i32
  }
  func.func @transform_3(%arg0: i32, %arg1: i32) -> (i32, i32) {
    %c0_i32 = arith.constant 0 : i32
    %c0_i32_0 = arith.constant 0 : i32
    %c0_i32_1 = arith.constant 0 : i32
    return %c0_i32, %c0_i32_0 : i32, i32
  }
  func.func @transform_4(%arg0: i32, %arg1: i32) -> (i32, i32) {
    %c0_i32 = arith.constant 0 : i32
    %c0_i32_0 = arith.constant 0 : i32
    %c0_i32_1 = arith.constant 0 : i32
    return %c0_i32, %c0_i32_0 : i32, i32
  }
  func.func @transform_5(%arg0: i32, %arg1: i32) -> (i32, i32) {
    %c0_i32 = arith.constant 0 : i32
    %c0_i32_0 = arith.constant 0 : i32
    %c0_i32_1 = arith.constant 0 : i32
    return %c0_i32, %c0_i32_0 : i32, i32
  }
  func.func @transform_6(%arg0: i32, %arg1: i32) -> (i32, i32) {
    %c0_i32 = arith.constant 0 : i32
    %c0_i32_0 = arith.constant 0 : i32
    return %arg0, %c0_i32 : i32, i32
  }
  func.func @transform_7(%arg0: i32, %arg1: i32) -> (i32, i32) {
    %c0_i32 = arith.constant 0 : i32
    %c0_i32_0 = arith.constant 0 : i32
    return %arg0, %c0_i32 : i32, i32
  }
}

module attributes {stable_mosaic.version = 11 : i64} {
  func.func @gin_layer_kernel(%arg0: i32, %arg1: i32, %arg2: memref<128x128xbf16, #tpu.memory_space<vmem>>, %arg3: memref<128x128xbf16, #tpu.memory_space<vmem>>, %arg4: memref<128x128xbf16, #tpu.memory_space<vmem>>, %arg5: memref<1x128xf32, #tpu.memory_space<vmem>>, %arg6: memref<128x128xbf16, #tpu.memory_space<vmem>>, %arg7: memref<1x128xf32, #tpu.memory_space<vmem>>, %arg8: memref<128x1xf32, #tpu.memory_space<vmem>>, %arg9: memref<128x128xbf16, #tpu.memory_space<vmem>>, %arg10: memref<128x128xf32, #tpu.memory_space<vmem>>) attributes {dimension_semantics = [#tpu.dimension_semantics<parallel>, #tpu.dimension_semantics<arbitrary>], iteration_bounds = array<i64: 1, 1>, scalar_prefetch = 0 : i64, scratch_operands = 1 : i64, tpu.core_type = #tpu.core_type<tc>, window_params = [{pipeline_mode = #tpu.pipeline_mode<synchronous>, transform_indices = @transform_0, window_bounds = array<i64: 128, 128>}, {transform_indices = @transform_1, window_bounds = array<i64: 128, 128>}, {pipeline_mode = #tpu.pipeline_mode<synchronous>, transform_indices = @transform_2, window_bounds = array<i64: 128, 128>}, {pipeline_mode = #tpu.pipeline_mode<synchronous>, transform_indices = @transform_3, window_bounds = array<i64: 1, 128>}, {pipeline_mode = #tpu.pipeline_mode<synchronous>, transform_indices = @transform_4, window_bounds = array<i64: 128, 128>}, {pipeline_mode = #tpu.pipeline_mode<synchronous>, transform_indices = @transform_5, window_bounds = array<i64: 1, 128>}, {transform_indices = @transform_6, window_bounds = array<i64: 128, 1>}, {transform_indices = @transform_7, window_bounds = array<i64: 128, 128>}]} {
    %c0_i32 = arith.constant 0 : i32
    %0 = arith.cmpi eq, %arg1, %c0_i32 : i32
    %1 = arith.extui %0 : i1 to i32
    %c0_i32_0 = arith.constant 0 : i32
    %2 = arith.cmpi ne, %1, %c0_i32_0 : i32
    scf.if %2 {
      %cst_9 = arith.constant 0.000000e+00 : f32
      %15 = vector.broadcast %cst_9 : f32 to vector<128x128xf32>
      %c0_10 = arith.constant 0 : index
      %c0_11 = arith.constant 0 : index
      %16 = vector.load %arg10[%c0_10, %c0_11] : memref<128x128xf32, #tpu.memory_space<vmem>>, vector<128x128xf32>
      tpu.vector_store %arg10[%c0_10, %c0_11], %15 {strides = array<i32>} : memref<128x128xf32, #tpu.memory_space<vmem>>, vector<128x128xf32>,
    } else {
    }
    %c128_i32 = arith.constant 128 : i32
    %3 = arith.muli %arg1, %c128_i32 : i32
    %4 = tpu.assume_multiple %3, 128 : i32
    %c0 = arith.constant 0 : index
    %c0_1 = arith.constant 0 : index
    %5 = vector.load %arg10[%c0, %c0_1] : memref<128x128xf32, #tpu.memory_space<vmem>>, vector<128x128xf32>
    %c0_2 = arith.constant 0 : index
    %c0_3 = arith.constant 0 : index
    %6 = vector.load %arg3[%c0_2, %c0_3] : memref<128x128xbf16, #tpu.memory_space<vmem>>, vector<128x128xbf16>
    %7 = arith.index_cast %4 : i32 to index
    %c0_4 = arith.constant 0 : index
    %8 = vector.load %arg2[%7, %c0_4] : memref<128x128xbf16, #tpu.memory_space<vmem>>, vector<128x128xbf16>
    %cst = arith.constant dense<0.000000e+00> : vector<128x128xf32>
    %9 = tpu.matmul %6, %8, %cst {dimension_numbers = #tpu.dot_dimension_numbers<[1], [0], [0], [1], [0, 0, 1, 1], [], []>} : vector<128x128xbf16>, vector<128x128xbf16>, vector<128x128xf32> -> vector<128x128xf32>
    %10 = arith.addf %5, %9 : vector<128x128xf32>
    %c0_5 = arith.constant 0 : index
    %c0_6 = arith.constant 0 : index
    %11 = vector.load %arg10[%c0_5, %c0_6] : memref<128x128xf32, #tpu.memory_space<vmem>>, vector<128x128xf32>
    tpu.vector_store %arg10[%c0_5, %c0_6], %10 {strides = array<i32>} : memref<128x128xf32, #tpu.memory_space<vmem>>, vector<128x128xf32>,
    %c0_i32_7 = arith.constant 0 : i32
    %12 = arith.cmpi eq, %arg1, %c0_i32_7 : i32
    %13 = arith.extui %12 : i1 to i32
    %c0_i32_8 = arith.constant 0 : i32
    %14 = arith.cmpi ne, %13, %c0_i32_8 : i32
    scf.if %14 {
      %c0_9 = arith.constant 0 : index
      %c0_10 = arith.constant 0 : index
      %15 = vector.load %arg10[%c0_9, %c0_10] : memref<128x128xf32, #tpu.memory_space<vmem>>, vector<128x128xf32>
      %16 = arith.truncf %15 : vector<128x128xf32> to vector<128x128xbf16>
      %c0_11 = arith.constant 0 : index
      %c0_12 = arith.constant 0 : index
      %17 = vector.load %arg4[%c0_11, %c0_12] : memref<128x128xbf16, #tpu.memory_space<vmem>>, vector<128x128xbf16>
      %cst_13 = arith.constant dense<0.000000e+00> : vector<128x128xf32>
      %18 = tpu.matmul %16, %17, %cst_13 {dimension_numbers = #tpu.dot_dimension_numbers<[1], [0], [0], [1], [0, 0, 1, 1], [], []>} : vector<128x128xbf16>, vector<128x128xbf16>, vector<128x128xf32> -> vector<128x128xf32>
      %c0_14 = arith.constant 0 : index
      %c0_15 = arith.constant 0 : index
      %19 = vector.load %arg5[%c0_14, %c0_15] : memref<1x128xf32, #tpu.memory_space<vmem>>, vector<1x128xf32>
      %20 = vector.broadcast %19 : vector<1x128xf32> to vector<128x128xf32>
      %21 = arith.addf %18, %20 : vector<128x128xf32>
      %cst_16 = arith.constant 0.000000e+00 : f32
      %22 = vector.broadcast %cst_16 : f32 to vector<128x128xf32>
      %23 = arith.maximumf %21, %22 : vector<128x128xf32>
      %24 = arith.truncf %23 : vector<128x128xf32> to vector<128x128xbf16>
      %c0_17 = arith.constant 0 : index
      %c0_18 = arith.constant 0 : index
      %25 = vector.load %arg6[%c0_17, %c0_18] : memref<128x128xbf16, #tpu.memory_space<vmem>>, vector<128x128xbf16>
      %cst_19 = arith.constant dense<0.000000e+00> : vector<128x128xf32>
      %26 = tpu.matmul %24, %25, %cst_19 {dimension_numbers = #tpu.dot_dimension_numbers<[1], [0], [0], [1], [0, 0, 1, 1], [], []>} : vector<128x128xbf16>, vector<128x128xbf16>, vector<128x128xf32> -> vector<128x128xf32>
      %c0_20 = arith.constant 0 : index
      %c0_21 = arith.constant 0 : index
      %27 = vector.load %arg7[%c0_20, %c0_21] : memref<1x128xf32, #tpu.memory_space<vmem>>, vector<1x128xf32>
      %28 = vector.broadcast %27 : vector<1x128xf32> to vector<128x128xf32>
      %29 = arith.addf %26, %28 : vector<128x128xf32>
      %cst_22 = arith.constant 0.000000e+00 : f32
      %30 = vector.broadcast %cst_22 : f32 to vector<128x128xf32>
      %31 = arith.maximumf %29, %30 : vector<128x128xf32>
      %c0_23 = arith.constant 0 : index
      %c0_24 = arith.constant 0 : index
      %32 = vector.load %arg8[%c0_23, %c0_24] : memref<128x1xf32, #tpu.memory_space<vmem>>, vector<128x1xf32>
      %33 = vector.broadcast %32 : vector<128x1xf32> to vector<128x128xf32>
      %34 = arith.mulf %31, %33 : vector<128x128xf32>
      %35 = arith.truncf %34 : vector<128x128xf32> to vector<128x128xbf16>
      %c0_25 = arith.constant 0 : index
      %c0_26 = arith.constant 0 : index
      %36 = vector.load %arg9[%c0_25, %c0_26] : memref<128x128xbf16, #tpu.memory_space<vmem>>, vector<128x128xbf16>
      tpu.vector_store %arg9[%c0_25, %c0_26], %35 {strides = array<i32>} : memref<128x128xbf16, #tpu.memory_space<vmem>>, vector<128x128xbf16>,
    } else {
    }
    return
  }
  func.func @transform_0(%arg0: i32, %arg1: i32) -> (i32, i32) {
    %c0_i32 = arith.constant 0 : i32
    %c0_i32_0 = arith.constant 0 : i32
    %c0_i32_1 = arith.constant 0 : i32
    return %c0_i32, %c0_i32_0 : i32, i32
  }
  func.func @transform_1(%arg0: i32, %arg1: i32) -> (i32, i32) {
    %c0_i32 = arith.constant 0 : i32
    return %arg0, %arg1 : i32, i32
  }
  func.func @transform_2(%arg0: i32, %arg1: i32) -> (i32, i32) {
    %c0_i32 = arith.constant 0 : i32
    %c0_i32_0 = arith.constant 0 : i32
    %c0_i32_1 = arith.constant 0 : i32
    return %c0_i32, %c0_i32_0 : i32, i32
  }
  func.func @transform_3(%arg0: i32, %arg1: i32) -> (i32, i32) {
    %c0_i32 = arith.constant 0 : i32
    %c0_i32_0 = arith.constant 0 : i32
    %c0_i32_1 = arith.constant 0 : i32
    return %c0_i32, %c0_i32_0 : i32, i32
  }
  func.func @transform_4(%arg0: i32, %arg1: i32) -> (i32, i32) {
    %c0_i32 = arith.constant 0 : i32
    %c0_i32_0 = arith.constant 0 : i32
    %c0_i32_1 = arith.constant 0 : i32
    return %c0_i32, %c0_i32_0 : i32, i32
  }
  func.func @transform_5(%arg0: i32, %arg1: i32) -> (i32, i32) {
    %c0_i32 = arith.constant 0 : i32
    %c0_i32_0 = arith.constant 0 : i32
    %c0_i32_1 = arith.constant 0 : i32
    return %c0_i32, %c0_i32_0 : i32, i32
  }
  func.func @transform_6(%arg0: i32, %arg1: i32) -> (i32, i32) {
    %c0_i32 = arith.constant 0 : i32
    %c0_i32_0 = arith.constant 0 : i32
    return %arg0, %c0_i32 : i32, i32
  }
  func.func @transform_7(%arg0: i32, %arg1: i32) -> (i32, i32) {
    %c0_i32 = arith.constant 0 : i32
    %c0_i32_0 = arith.constant 0 : i32
    return %arg0, %c0_i32 : i32, i32
  }
}

module attributes {stable_mosaic.version = 11 : i64} {
  func.func @pool_head_kernel(%arg0: i32, %arg1: memref<8x128xbf16, #tpu.memory_space<vmem>>, %arg2: memref<128x128xbf16, #tpu.memory_space<vmem>>, %arg3: memref<128x128xbf16, #tpu.memory_space<vmem>>, %arg4: memref<1x128xf32, #tpu.memory_space<vmem>>, %arg5: memref<128x128xbf16, #tpu.memory_space<vmem>>, %arg6: memref<1x128xf32, #tpu.memory_space<vmem>>, %arg7: memref<8x128xf32, #tpu.memory_space<vmem>>, %arg8: memref<8x128xf32, #tpu.memory_space<vmem>>) attributes {dimension_semantics = [#tpu.dimension_semantics<arbitrary>], iteration_bounds = array<i64: 1>, scalar_prefetch = 0 : i64, scratch_operands = 1 : i64, tpu.core_type = #tpu.core_type<tc>, window_params = [{transform_indices = @transform_0, window_bounds = array<i64: 8, 128>}, {transform_indices = @transform_1, window_bounds = array<i64: 128, 128>}, {pipeline_mode = #tpu.pipeline_mode<synchronous>, transform_indices = @transform_2, window_bounds = array<i64: 128, 128>}, {pipeline_mode = #tpu.pipeline_mode<synchronous>, transform_indices = @transform_3, window_bounds = array<i64: 1, 128>}, {pipeline_mode = #tpu.pipeline_mode<synchronous>, transform_indices = @transform_4, window_bounds = array<i64: 128, 128>}, {pipeline_mode = #tpu.pipeline_mode<synchronous>, transform_indices = @transform_5, window_bounds = array<i64: 1, 128>}, {pipeline_mode = #tpu.pipeline_mode<synchronous>, transform_indices = @transform_6, window_bounds = array<i64: 8, 128>}]} {
    %c0_i32 = arith.constant 0 : i32
    %0 = arith.cmpi eq, %arg0, %c0_i32 : i32
    %1 = arith.extui %0 : i1 to i32
    %c0_i32_0 = arith.constant 0 : i32
    %2 = arith.cmpi ne, %1, %c0_i32_0 : i32
    scf.if %2 {
      %cst_10 = arith.constant 0.000000e+00 : f32
      %12 = vector.broadcast %cst_10 : f32 to vector<8x128xf32>
      %c0_11 = arith.constant 0 : index
      %c0_12 = arith.constant 0 : index
      %13 = vector.load %arg8[%c0_11, %c0_12] : memref<8x128xf32, #tpu.memory_space<vmem>>, vector<8x128xf32>
      tpu.vector_store %arg8[%c0_11, %c0_12], %12 {strides = array<i32>} : memref<8x128xf32, #tpu.memory_space<vmem>>, vector<8x128xf32>,
    } else {
    }
    %c0 = arith.constant 0 : index
    %c0_1 = arith.constant 0 : index
    %3 = vector.load %arg8[%c0, %c0_1] : memref<8x128xf32, #tpu.memory_space<vmem>>, vector<8x128xf32>
    %c0_2 = arith.constant 0 : index
    %c0_3 = arith.constant 0 : index
    %4 = vector.load %arg1[%c0_2, %c0_3] : memref<8x128xbf16, #tpu.memory_space<vmem>>, vector<8x128xbf16>
    %c0_4 = arith.constant 0 : index
    %c0_5 = arith.constant 0 : index
    %5 = vector.load %arg2[%c0_4, %c0_5] : memref<128x128xbf16, #tpu.memory_space<vmem>>, vector<128x128xbf16>
    %cst = arith.constant dense<0.000000e+00> : vector<8x128xf32>
    %6 = tpu.matmul %4, %5, %cst {dimension_numbers = #tpu.dot_dimension_numbers<[1], [0], [0], [1], [0, 0, 1, 1], [], []>} : vector<8x128xbf16>, vector<128x128xbf16>, vector<8x128xf32> -> vector<8x128xf32>
    %7 = arith.addf %3, %6 : vector<8x128xf32>
    %c0_6 = arith.constant 0 : index
    %c0_7 = arith.constant 0 : index
    %8 = vector.load %arg8[%c0_6, %c0_7] : memref<8x128xf32, #tpu.memory_space<vmem>>, vector<8x128xf32>
    tpu.vector_store %arg8[%c0_6, %c0_7], %7 {strides = array<i32>} : memref<8x128xf32, #tpu.memory_space<vmem>>, vector<8x128xf32>,
    %c0_i32_8 = arith.constant 0 : i32
    %9 = arith.cmpi eq, %arg0, %c0_i32_8 : i32
    %10 = arith.extui %9 : i1 to i32
    %c0_i32_9 = arith.constant 0 : i32
    %11 = arith.cmpi ne, %10, %c0_i32_9 : i32
    scf.if %11 {
      %c0_10 = arith.constant 0 : index
      %c0_11 = arith.constant 0 : index
      %12 = vector.load %arg8[%c0_10, %c0_11] : memref<8x128xf32, #tpu.memory_space<vmem>>, vector<8x128xf32>
      %13 = arith.truncf %12 : vector<8x128xf32> to vector<8x128xbf16>
      %c0_12 = arith.constant 0 : index
      %c0_13 = arith.constant 0 : index
      %14 = vector.load %arg3[%c0_12, %c0_13] : memref<128x128xbf16, #tpu.memory_space<vmem>>, vector<128x128xbf16>
      %cst_14 = arith.constant dense<0.000000e+00> : vector<8x128xf32>
      %15 = tpu.matmul %13, %14, %cst_14 {dimension_numbers = #tpu.dot_dimension_numbers<[1], [0], [0], [1], [0, 0, 1, 1], [], []>} : vector<8x128xbf16>, vector<128x128xbf16>, vector<8x128xf32> -> vector<8x128xf32>
      %c0_15 = arith.constant 0 : index
      %c0_16 = arith.constant 0 : index
      %16 = vector.load %arg4[%c0_15, %c0_16] : memref<1x128xf32, #tpu.memory_space<vmem>>, vector<1x128xf32>
      %17 = vector.broadcast %16 : vector<1x128xf32> to vector<8x128xf32>
      %18 = arith.addf %15, %17 : vector<8x128xf32>
      %cst_17 = arith.constant 0.000000e+00 : f32
      %19 = vector.broadcast %cst_17 : f32 to vector<8x128xf32>
      %20 = arith.maximumf %18, %19 : vector<8x128xf32>
      %21 = arith.truncf %20 : vector<8x128xf32> to vector<8x128xbf16>
      %c0_18 = arith.constant 0 : index
      %c0_19 = arith.constant 0 : index
      %22 = vector.load %arg5[%c0_18, %c0_19] : memref<128x128xbf16, #tpu.memory_space<vmem>>, vector<128x128xbf16>
      %cst_20 = arith.constant dense<0.000000e+00> : vector<8x128xf32>
      %23 = tpu.matmul %21, %22, %cst_20 {dimension_numbers = #tpu.dot_dimension_numbers<[1], [0], [0], [1], [0, 0, 1, 1], [], []>} : vector<8x128xbf16>, vector<128x128xbf16>, vector<8x128xf32> -> vector<8x128xf32>
      %c0_21 = arith.constant 0 : index
      %c0_22 = arith.constant 0 : index
      %24 = vector.load %arg6[%c0_21, %c0_22] : memref<1x128xf32, #tpu.memory_space<vmem>>, vector<1x128xf32>
      %25 = vector.broadcast %24 : vector<1x128xf32> to vector<8x128xf32>
      %26 = arith.addf %23, %25 : vector<8x128xf32>
      %c0_23 = arith.constant 0 : index
      %c0_24 = arith.constant 0 : index
      %27 = vector.load %arg7[%c0_23, %c0_24] : memref<8x128xf32, #tpu.memory_space<vmem>>, vector<8x128xf32>
      tpu.vector_store %arg7[%c0_23, %c0_24], %26 {strides = array<i32>} : memref<8x128xf32, #tpu.memory_space<vmem>>, vector<8x128xf32>,
    } else {
    }
    return
  }
  func.func @transform_0(%arg0: i32) -> (i32, i32) {
    %c0_i32 = arith.constant 0 : i32
    %c0_i32_0 = arith.constant 0 : i32
    return %c0_i32, %arg0 : i32, i32
  }
  func.func @transform_1(%arg0: i32) -> (i32, i32) {
    %c0_i32 = arith.constant 0 : i32
    %c0_i32_0 = arith.constant 0 : i32
    return %arg0, %c0_i32 : i32, i32
  }
  func.func @transform_2(%arg0: i32) -> (i32, i32) {
    %c0_i32 = arith.constant 0 : i32
    %c0_i32_0 = arith.constant 0 : i32
    %c0_i32_1 = arith.constant 0 : i32
    return %c0_i32, %c0_i32_0 : i32, i32
  }
  func.func @transform_3(%arg0: i32) -> (i32, i32) {
    %c0_i32 = arith.constant 0 : i32
    %c0_i32_0 = arith.constant 0 : i32
    %c0_i32_1 = arith.constant 0 : i32
    return %c0_i32, %c0_i32_0 : i32, i32
  }
  func.func @transform_4(%arg0: i32) -> (i32, i32) {
    %c0_i32 = arith.constant 0 : i32
    %c0_i32_0 = arith.constant 0 : i32
    %c0_i32_1 = arith.constant 0 : i32
    return %c0_i32, %c0_i32_0 : i32, i32
  }
  func.func @transform_5(%arg0: i32) -> (i32, i32) {
    %c0_i32 = arith.constant 0 : i32
    %c0_i32_0 = arith.constant 0 : i32
    %c0_i32_1 = arith.constant 0 : i32
    return %c0_i32, %c0_i32_0 : i32, i32
  }
  func.func @transform_6(%arg0: i32) -> (i32, i32) {
    %c0_i32 = arith.constant 0 : i32
    %c0_i32_0 = arith.constant 0 : i32
    %c0_i32_1 = arith.constant 0 : i32
    return %c0_i32, %c0_i32_0 : i32, i32
  }
}

</mosaic_0001>

<llo_original>
// kernel: gin_forward.4
$region0: #{gin_forward.4}
  #allocation0 [shape = 'u32[]', space=smem, size = 0x4, offset = 0x4, fixed_abs, tag = 'smem constant byte address 0x4 - core index']
  #allocation1 [shape = 'u32[144,128]{1,0:T(1,128)}', space=vmem, size = 0x12000, scoped, tag = 'internal scratch']
  #allocation2 [shape = 'f32[128,128]{1,0:T(8,128)}', space=vmem, size = 0x10000, scoped, tag = 'scratch operand']
  %s0 = inlined_call_operand.vmem [shape: bf16[128,128], index: 0, kind: input, shape index: {}]
  %s1 = inlined_call_operand.vmem [shape: bf16[128,128], index: 1, kind: input, shape index: {}]
  %s2 = inlined_call_operand.vmem [shape: bf16[128,128], index: 2, kind: input, shape index: {}]
  %s3 = inlined_call_operand.vmem [shape: f32[1,128], index: 3, kind: input, shape index: {}]
  %s4 = inlined_call_operand.vmem [shape: bf16[128,128], index: 4, kind: input, shape index: {}]
  %s5 = inlined_call_operand.vmem [shape: f32[1,128], index: 5, kind: input, shape index: {}]
  %s6 = inlined_call_operand.vmem [shape: f32[128,1], index: 6, kind: input, shape index: {}]
  %s7 = inlined_call_operand.vmem [shape: bf16[128,128], index: 7, kind: output, shape index: {}]
  %s8 = sld [smem:[#allocation0]]
  $region46: #{gin_forward.4} parent=0
    _
  %s10 = ssub.s32 1, %s8
  %s11 = scalar_select 0, %s10, %s8
  // Predicated region
  $region2: #{gin_forward.4} parent=0 // pred_check
    _
  $region3: #{gin_forward.4} parent=0 // pred_check_branch
    %13 = sbr.rel (0) target = $region5
  $region4: #{gin_forward.4} parent=0 // pred_region
    _
  $region5: #{gin_forward.4} parent=0 // pred_fallthru
    _
  // Predicated region
  $region6: #{gin_forward.4} parent=0 // pred_check
    _
  $region7: #{gin_forward.4} parent=0 // pred_check_branch
    %15 = sbr.rel (0) target = $region9
  $region8: #{gin_forward.4} parent=0 // pred_region
    _
  $region9: #{gin_forward.4} parent=0 // pred_fallthru
    _
  // Predicated region
  $region10: #{gin_forward.4} parent=0 // pred_check
    _
  $region11: #{gin_forward.4} parent=0 // pred_check_branch
    %17 = sbr.rel (0) target = $region13
  $region12: #{gin_forward.4} parent=0 // pred_region
    _
  $region13: #{gin_forward.4} parent=0 // pred_fallthru
    _
  // Predicated region
  $region14: #{gin_forward.4} parent=0 // pred_check
    _
  $region15: #{gin_forward.4} parent=0 // pred_check_branch
    %19 = sbr.rel (0) target = $region17
  $region16: #{gin_forward.4} parent=0 // pred_region
    _
  $region17: #{gin_forward.4} parent=0 // pred_fallthru
    _
  // Predicated region
  $region18: #{gin_forward.4} parent=0 // pred_check
    _
  $region19: #{gin_forward.4} parent=0 // pred_check_branch
    %21 = sbr.rel (0) target = $region21
  $region20: #{gin_forward.4} parent=0 // pred_region
    _
  $region21: #{gin_forward.4} parent=0 // pred_fallthru
    _
  // Predicated region
  $region22: #{gin_forward.4} parent=0 // pred_check
    _
  $region23: #{gin_forward.4} parent=0 // pred_check_branch
    %23 = sbr.rel (0) target = $region25
  $region24: #{gin_forward.4} parent=0 // pred_region
    _
  $region25: #{gin_forward.4} parent=0 // pred_fallthru
    _
  // Predicated region
  $region26: #{gin_forward.4} parent=0 // pred_check
    _
  $region27: #{gin_forward.4} parent=0 // pred_check_branch
    %25 = sbr.rel (0) target = $region29
  $region28: #{gin_forward.4} parent=0 // pred_region
    _
  $region29: #{gin_forward.4} parent=0 // pred_fallthru
    _
  %p27 = scmp.eq.s32.totalorder 0, 0
  // Predicated region
  $region30: #{gin_forward.4} parent=0 // pred_check
    %p28 = pneg %p27
  $region31: #{gin_forward.4} parent=0 // pred_check_branch
    %30 = sbr.rel (%p28) target = $region33
  $region32: #{gin_forward.4} parent=0 // pred_region
    %31 = vst [vmem:[#allocation2] sm:$0xff] 0.0
    %32 = vst [vmem:[#allocation2 + $0x8] sm:$0xff] 0.0
    %33 = vst [vmem:[#allocation2 + $0x10] sm:$0xff] 0.0
    %34 = vst [vmem:[#allocation2 + $0x18] sm:$0xff] 0.0
    %35 = vst [vmem:[#allocation2 + $0x20] sm:$0xff] 0.0
    %36 = vst [vmem:[#allocation2 + $0x28] sm:$0xff] 0.0
    %37 = vst [vmem:[#allocation2 + $0x30] sm:$0xff] 0.0
    %38 = vst [vmem:[#allocation2 + $0x38] sm:$0xff] 0.0
    %39 = vst [vmem:[#allocation2 + $0x40] sm:$0xff] 0.0
    %40 = vst [vmem:[#allocation2 + $0x48] sm:$0xff] 0.0
    %41 = vst [vmem:[#allocation2 + $0x50] sm:$0xff] 0.0
    %42 = vst [vmem:[#allocation2 + $0x58] sm:$0xff] 0.0
    %43 = vst [vmem:[#allocation2 + $0x60] sm:$0xff] 0.0
    %44 = vst [vmem:[#allocation2 + $0x68] sm:$0xff] 0.0
    %45 = vst [vmem:[#allocation2 + $0x70] sm:$0xff] 0.0
    %46 = vst [vmem:[#allocation2 + $0x78] sm:$0xff] 0.0
  $region33: #{gin_forward.4} parent=0 // pred_fallthru
    _
  %s47 = smul.u32 0, 128
  %v48 = vld [vmem:[#allocation2] sm:$0xff]
  %v49 = vld [vmem:[#allocation2 + $0x8] sm:$0xff]
  %v50 = vld [vmem:[#allocation2 + $0x10] sm:$0xff]
  %v51 = vld [vmem:[#allocation2 + $0x18] sm:$0xff]
  %v52 = vld [vmem:[#allocation2 + $0x20] sm:$0xff]
  %v53 = vld [vmem:[#allocation2 + $0x28] sm:$0xff]
  %v54 = vld [vmem:[#allocation2 + $0x30] sm:$0xff]
  %v55 = vld [vmem:[#allocation2 + $0x38] sm:$0xff]
  %v56 = vld [vmem:[#allocation2 + $0x40] sm:$0xff]
  %v57 = vld [vmem:[#allocation2 + $0x48] sm:$0xff]
  %v58 = vld [vmem:[#allocation2 + $0x50] sm:$0xff]
  %v59 = vld [vmem:[#allocation2 + $0x58] sm:$0xff]
  %v60 = vld [vmem:[#allocation2 + $0x60] sm:$0xff]
  %v61 = vld [vmem:[#allocation2 + $0x68] sm:$0xff]
  %v62 = vld [vmem:[#allocation2 + $0x70] sm:$0xff]
  %v63 = vld [vmem:[#allocation2 + $0x78] sm:$0xff]
  %v64 = vld [vmem:[%s1] sm:$0xf]
  %v65 = vld [vmem:[%s1 + $0x4] sm:$0xf]
  %v66 = vld [vmem:[%s1 + $0x8] sm:$0xf]
  %v67 = vld [vmem:[%s1 + $0xc] sm:$0xf]
  %v68 = vld [vmem:[%s1 + $0x10] sm:$0xf]
  %v69 = vld [vmem:[%s1 + $0x14] sm:$0xf]
  %v70 = vld [vmem:[%s1 + $0x18] sm:$0xf]
  %v71 = vld [vmem:[%s1 + $0x1c] sm:$0xf]
  %v72 = vld [vmem:[%s1 + $0x20] sm:$0xf]
  %v73 = vld [vmem:[%s1 + $0x24] sm:$0xf]
  %v74 = vld [vmem:[%s1 + $0x28] sm:$0xf]
  %v75 = vld [vmem:[%s1 + $0x2c] sm:$0xf]
  %v76 = vld [vmem:[%s1 + $0x30] sm:$0xf]
  %v77 = vld [vmem:[%s1 + $0x34] sm:$0xf]
  %v78 = vld [vmem:[%s1 + $0x38] sm:$0xf]
  %v79 = vld [vmem:[%s1 + $0x3c] sm:$0xf]
  %s80 = sshra.s32 %s47, 3
  %s81 = sand.u32 %s47, 7
  %s82 = smul.addr %s80, 4
  %s83 = scalar_lea.vmem %s0, %s82
  %v84 = vld [vmem:[%s83] sm:$0xf]
  %v85 = vld [vmem:[%s83 + $0x4] sm:$0xf]
  %v86 = vld [vmem:[%s83 + $0x8] sm:$0xf]
  %v87 = vld [vmem:[%s83 + $0xc] sm:$0xf]
  %v88 = vld [vmem:[%s83 + $0x10] sm:$0xf]
  %v89 = vld [vmem:[%s83 + $0x14] sm:$0xf]
  %v90 = vld [vmem:[%s83 + $0x18] sm:$0xf]
  %v91 = vld [vmem:[%s83 + $0x1c] sm:$0xf]
  %v92 = vld [vmem:[%s83 + $0x20] sm:$0xf]
  %v93 = vld [vmem:[%s83 + $0x24] sm:$0xf]
  %v94 = vld [vmem:[%s83 + $0x28] sm:$0xf]
  %v95 = vld [vmem:[%s83 + $0x2c] sm:$0xf]
  %v96 = vld [vmem:[%s83 + $0x30] sm:$0xf]
  %v97 = vld [vmem:[%s83 + $0x34] sm:$0xf]
  %v98 = vld [vmem:[%s83 + $0x38] sm:$0xf]
  %v99 = vld [vmem:[%s83 + $0x3c] sm:$0xf]
  %v116 = vunpack.c.l.b16 %v64
  %v117 = vunpack.c.l.b16 %v65
  %v118 = vunpack.c.l.b16 %v66
  %v119 = vunpack.c.l.b16 %v67
  %v120 = vunpack.c.l.b16 %v68
  %v121 = vunpack.c.l.b16 %v69
  %v122 = vunpack.c.l.b16 %v70
  %v123 = vunpack.c.l.b16 %v71
  %v124 = vunpack.c.l.b16 %v72
  %v125 = vunpack.c.l.b16 %v73
  %v126 = vunpack.c.l.b16 %v74
  %v127 = vunpack.c.l.b16 %v75
  %v128 = vunpack.c.l.b16 %v76
  %v129 = vunpack.c.l.b16 %v77
  %v130 = vunpack.c.l.b16 %v78
  %v131 = vunpack.c.l.b16 %v79
  %v132 = vpack.c.b16 %v117, %v116
  %v133 = vpack.c.b16 %v119, %v118
  %v134 = vpack.c.b16 %v121, %v120
  %v135 = vpack.c.b16 %v123, %v122
  %v136 = vpack.c.b16 %v125, %v124
  %v137 = vpack.c.b16 %v127, %v126
  %v138 = vpack.c.b16 %v129, %v128
  %v139 = vpack.c.b16 %v131, %v130
  %v164 = vunpack.c.l.b16 %v84
  %v165 = vunpack.c.l.b16 %v85
  %v166 = vunpack.c.l.b16 %v86
  %v167 = vunpack.c.l.b16 %v87
  %v168 = vunpack.c.l.b16 %v88
  %v169 = vunpack.c.l.b16 %v89
  %v170 = vunpack.c.l.b16 %v90
  %v171 = vunpack.c.l.b16 %v91
  %v172 = vunpack.c.l.b16 %v92
  %v173 = vunpack.c.l.b16 %v93
  %v174 = vunpack.c.l.b16 %v94
  %v175 = vunpack.c.l.b16 %v95
  %v176 = vunpack.c.l.b16 %v96
  %v177 = vunpack.c.l.b16 %v97
  %v178 = vunpack.c.l.b16 %v98
  %v179 = vunpack.c.l.b16 %v99
  %v180 = vpack.c.b16 %v165, %v164
  %v181 = vpack.c.b16 %v167, %v166
  %v182 = vpack.c.b16 %v169, %v168
  %v183 = vpack.c.b16 %v171, %v170
  %v184 = vpack.c.b16 %v173, %v172
  %v185 = vpack.c.b16 %v175, %v174
  %v186 = vpack.c.b16 %v177, %v176
  %v187 = vpack.c.b16 %v179, %v178
  %196 = vmatprep.subr.bf16.mxu0 0
  %197 = vmatpush1.bf16.msra.mxu0 %v180
  %198 = vmatprep.subr.bf16.mxu0 0
  %199 = vmatpush1.bf16.msra.mxu0 %v181
  %200 = vmatprep.subr.bf16.mxu0 0
  %201 = vmatpush1.bf16.msra.mxu0 %v182
  %202 = vmatprep.subr.bf16.mxu0 0
  %203 = vmatpush1.bf16.msra.mxu0 %v183
  %204 = vmatprep.subr.bf16.mxu0 0
  %205 = vmatpush1.bf16.msra.mxu0 %v184
  %206 = vmatprep.subr.bf16.mxu0 0
  %207 = vmatpush1.bf16.msra.mxu0 %v185
  %208 = vmatprep.subr.bf16.mxu0 0
  %209 = vmatpush1.bf16.msra.mxu0 %v186
  %210 = vmatprep.subr.bf16.mxu0 0
  %211 = vmatpush1.bf16.msra.mxu0 %v187
  %212 = vmatprep.subr.bf16.mxu0 0
  %213 = vmatpush1.bf16.msra.mxu0 0
  %214 = vmatprep.subr.bf16.mxu0 0
  %215 = vmatpush1.bf16.msra.mxu0 0
  %216 = vmatprep.subr.bf16.mxu0 0
  %217 = vmatpush1.bf16.msra.mxu0 0
  %218 = vmatprep.subr.bf16.mxu0 0
  %219 = vmatpush1.bf16.msra.mxu0 0
  %220 = vmatprep.subr.bf16.mxu0 0
  %221 = vmatpush1.bf16.msra.mxu0 0
  %222 = vmatprep.subr.bf16.mxu0 0
  %223 = vmatpush1.bf16.msra.mxu0 0
  %224 = vmatprep.subr.bf16.mxu0 0
  %225 = vmatpush1.bf16.msra.mxu0 0
  %226 = vmatprep.subr.bf16.mxu0 0
  %227 = vmatpush1.bf16.msra.mxu0 0
  %228 = vmatprep.mubr.bf16.mxu0 0
  %229 = vmatmul.mubr.bf16.gmra.mrb[0].mxu0 %v132
  %v230 = vpop.f32.mrb[0].mxu0
  %v231 = vadd.f32 0.0, %v230
  %v232 = vpop.f32.mrb[0].mxu0
  %v233 = vpop.f32.mrb[0].mxu0
  %v234 = vadd.f32 0.0, %v233
  %v235 = vpop.f32.mrb[0].mxu0
  %236 = vmatprep.mubr.bf16.mxu0 0
  %237 = vmatmul.mubr.bf16.gmra.mrb[0].mxu0 %v133
  %v238 = vpop.f32.mrb[0].mxu0
  %v239 = vadd.f32 0.0, %v238
  %v240 = vpop.f32.mrb[0].mxu0
  %v241 = vpop.f32.mrb[0].mxu0
  %v242 = vadd.f32 0.0, %v241
  %v243 = vpop.f32.mrb[0].mxu0
  %244 = vmatprep.mubr.bf16.mxu0 0
  %245 = vmatmul.mubr.bf16.gmra.mrb[0].mxu0 %v134
  %v246 = vpop.f32.mrb[0].mxu0
  %v247 = vadd.f32 0.0, %v246
  %v248 = vpop.f32.mrb[0].mxu0
  %v249 = vpop.f32.mrb[0].mxu0
  %v250 = vadd.f32 0.0, %v249
  %v251 = vpop.f32.mrb[0].mxu0
  %252 = vmatprep.mubr.bf16.mxu0 0
  %253 = vmatmul.mubr.bf16.gmra.mrb[0].mxu0 %v135
  %v254 = vpop.f32.mrb[0].mxu0
  %v255 = vadd.f32 0.0, %v254
  %v256 = vpop.f32.mrb[0].mxu0
  %v257 = vpop.f32.mrb[0].mxu0
  %v258 = vadd.f32 0.0, %v257
  %v259 = vpop.f32.mrb[0].mxu0
  %260 = vmatprep.mubr.bf16.mxu0 0
  %261 = vmatmul.mubr.bf16.gmra.mrb[0].mxu0 %v136
  %v262 = vpop.f32.mrb[0].mxu0
  %v263 = vadd.f32 0.0, %v262
  %v264 = vpop.f32.mrb[0].mxu0
  %v265 = vpop.f32.mrb[0].mxu0
  %v266 = vadd.f32 0.0, %v265
  %v267 = vpop.f32.mrb[0].mxu0
  %268 = vmatprep.mubr.bf16.mxu0 0
  %269 = vmatmul.mubr.bf16.gmra.mrb[0].mxu0 %v137
  %v270 = vpop.f32.mrb[0].mxu0
  %v271 = vadd.f32 0.0, %v270
  %v272 = vpop.f32.mrb[0].mxu0
  %v273 = vpop.f32.mrb[0].mxu0
  %v274 = vadd.f32 0.0, %v273
  %v275 = vpop.f32.mrb[0].mxu0
  %276 = vmatprep.mubr.bf16.mxu0 0
  %277 = vmatmul.mubr.bf16.gmra.mrb[0].mxu0 %v138
  %v278 = vpop.f32.mrb[0].mxu0
  %v279 = vadd.f32 0.0, %v278
  %v280 = vpop.f32.mrb[0].mxu0
  %v281 = vpop.f32.mrb[0].mxu0
  %v282 = vadd.f32 0.0, %v281
  %v283 = vpop.f32.mrb[0].mxu0
  %284 = vmatprep.mubr.bf16.mxu0 0
  %285 = vmatmul.mubr.bf16.gmra.mrb[0].mxu0 %v139
  %v286 = vpop.f32.mrb[0].mxu0
  %v287 = vadd.f32 0.0, %v286
  %v288 = vpop.f32.mrb[0].mxu0
  %v289 = vpop.f32.mrb[0].mxu0
  %v290 = vadd.f32 0.0, %v289
  %v291 = vpop.f32.mrb[0].mxu0
  %292 = vdwg.mxu0
  %v293 = vadd.f32 %v48, %v231
  %v294 = vadd.f32 %v49, %v234
  %v295 = vadd.f32 %v50, %v239
  %v296 = vadd.f32 %v51, %v242
  %v297 = vadd.f32 %v52, %v247
  %v298 = vadd.f32 %v53, %v250
  %v299 = vadd.f32 %v54, %v255
  %v300 = vadd.f32 %v55, %v258
  %v301 = vadd.f32 %v56, %v263
  %v302 = vadd.f32 %v57, %v266
  %v303 = vadd.f32 %v58, %v271
  %v304 = vadd.f32 %v59, %v274
  %v305 = vadd.f32 %v60, %v279
  %v306 = vadd.f32 %v61, %v282
  %v307 = vadd.f32 %v62, %v287
  %v308 = vadd.f32 %v63, %v290
  %309 = vst [vmem:[#allocation2] sm:$0xff] %v293
  %310 = vst [vmem:[#allocation2 + $0x8] sm:$0xff] %v294
  %311 = vst [vmem:[#allocation2 + $0x10] sm:$0xff] %v295
  %312 = vst [vmem:[#allocation2 + $0x18] sm:$0xff] %v296
  %313 = vst [vmem:[#allocation2 + $0x20] sm:$0xff] %v297
  %314 = vst [vmem:[#allocation2 + $0x28] sm:$0xff] %v298
  %315 = vst [vmem:[#allocation2 + $0x30] sm:$0xff] %v299
  %316 = vst [vmem:[#allocation2 + $0x38] sm:$0xff] %v300
  %317 = vst [vmem:[#allocation2 + $0x40] sm:$0xff] %v301
  %318 = vst [vmem:[#allocation2 + $0x48] sm:$0xff] %v302
  %319 = vst [vmem:[#allocation2 + $0x50] sm:$0xff] %v303
  %320 = vst [vmem:[#allocation2 + $0x58] sm:$0xff] %v304
  %321 = vst [vmem:[#allocation2 + $0x60] sm:$0xff] %v305
  %322 = vst [vmem:[#allocation2 + $0x68] sm:$0xff] %v306
  %323 = vst [vmem:[#allocation2 + $0x70] sm:$0xff] %v307
  %324 = vst [vmem:[#allocation2 + $0x78] sm:$0xff] %v308
  // Predicated region
  $region34: #{gin_forward.4} parent=0 // pred_check
    %p325 = pneg %p27
  $region35: #{gin_forward.4} parent=0 // pred_check_branch
    %327 = sbr.rel (%p325) target = $region37
  $region36: #{gin_forward.4} parent=0 // pred_region
    %v328 = vld [vmem:[#allocation2] sm:$0xff]
    %v329 = vld [vmem:[#allocation2 + $0x8] sm:$0xff]
    %v330 = vld [vmem:[#allocation2 + $0x10] sm:$0xff]
    %v331 = vld [vmem:[#allocation2 + $0x18] sm:$0xff]
    %v332 = vld [vmem:[#allocation2 + $0x20] sm:$0xff]
    %v333 = vld [vmem:[#allocation2 + $0x28] sm:$0xff]
    %v334 = vld [vmem:[#allocation2 + $0x30] sm:$0xff]
    %v335 = vld [vmem:[#allocation2 + $0x38] sm:$0xff]
    %v336 = vld [vmem:[#allocation2 + $0x40] sm:$0xff]
    %v337 = vld [vmem:[#allocation2 + $0x48] sm:$0xff]
    %v338 = vld [vmem:[#allocation2 + $0x50] sm:$0xff]
    %v339 = vld [vmem:[#allocation2 + $0x58] sm:$0xff]
    %v340 = vld [vmem:[#allocation2 + $0x60] sm:$0xff]
    %v341 = vld [vmem:[#allocation2 + $0x68] sm:$0xff]
    %v342 = vld [vmem:[#allocation2 + $0x70] sm:$0xff]
    %v343 = vld [vmem:[#allocation2 + $0x78] sm:$0xff]
    %v344 = vpack.c.bf16 %v329, %v328
    %v345 = vpack.c.bf16 %v331, %v330
    %v346 = vpack.c.bf16 %v333, %v332
    %v347 = vpack.c.bf16 %v335, %v334
    %v348 = vpack.c.bf16 %v337, %v336
    %v349 = vpack.c.bf16 %v339, %v338
    %v350 = vpack.c.bf16 %v341, %v340
    %v351 = vpack.c.bf16 %v343, %v342
    %v352 = vld [vmem:[%s2] sm:$0xf]
    %v353 = vld [vmem:[%s2 + $0x4] sm:$0xf]
    %v354 = vld [vmem:[%s2 + $0x8] sm:$0xf]
    %v355 = vld [vmem:[%s2 + $0xc] sm:$0xf]
    %v356 = vld [vmem:[%s2 + $0x10] sm:$0xf]
    %v357 = vld [vmem:[%s2 + $0x14] sm:$0xf]
    %v358 = vld [vmem:[%s2 + $0x18] sm:$0xf]
    %v359 = vld [vmem:[%s2 + $0x1c] sm:$0xf]
    %v360 = vld [vmem:[%s2 + $0x20] sm:$0xf]
    %v361 = vld [vmem:[%s2 + $0x24] sm:$0xf]
    %v362 = vld [vmem:[%s2 + $0x28] sm:$0xf]
    %v363 = vld [vmem:[%s2 + $0x2c] sm:$0xf]
    %v364 = vld [vmem:[%s2 + $0x30] sm:$0xf]
    %v365 = vld [vmem:[%s2 + $0x34] sm:$0xf]
    %v366 = vld [vmem:[%s2 + $0x38] sm:$0xf]
    %v367 = vld [vmem:[%s2 + $0x3c] sm:$0xf]
    %v368 = vld [vmem:[%s3] sm:$0x1]
    %v370 = vlaneseq
    %v371 = vshrl.u32 %v370, 7
    %v372 = vsub.s32 0, %v371
    %v373 = vrot.slane %v368, %v372
    %v391 = vunpack.c.l.b16 %v352
    %v392 = vunpack.c.l.b16 %v353
    %v393 = vunpack.c.l.b16 %v354
    %v394 = vunpack.c.l.b16 %v355
    %v395 = vunpack.c.l.b16 %v356
    %v396 = vunpack.c.l.b16 %v357
    %v397 = vunpack.c.l.b16 %v358
    %v398 = vunpack.c.l.b16 %v359
    %v399 = vunpack.c.l.b16 %v360
    %v400 = vunpack.c.l.b16 %v361
    %v401 = vunpack.c.l.b16 %v362
    %v402 = vunpack.c.l.b16 %v363
    %v403 = vunpack.c.l.b16 %v364
    %v404 = vunpack.c.l.b16 %v365
    %v405 = vunpack.c.l.b16 %v366
    %v406 = vunpack.c.l.b16 %v367
    %v407 = vpack.c.b16 %v392, %v391
    %v408 = vpack.c.b16 %v394, %v393
    %v409 = vpack.c.b16 %v396, %v395
    %v410 = vpack.c.b16 %v398, %v397
    %v411 = vpack.c.b16 %v400, %v399
    %v412 = vpack.c.b16 %v402, %v401
    %v413 = vpack.c.b16 %v404, %v403
    %v414 = vpack.c.b16 %v406, %v405
    %423 = vmatprep.subr.bf16.mxu0 0
    %424 = vmatpush1.bf16.msra.mxu0 %v407
    %425 = vmatprep.subr.bf16.mxu0 0
    %426 = vmatpush1.bf16.msra.mxu0 %v408
    %427 = vmatprep.subr.bf16.mxu0 0
    %428 = vmatpush1.bf16.msra.mxu0 %v409
    %429 = vmatprep.subr.bf16.mxu0 0
    %430 = vmatpush1.bf16.msra.mxu0 %v410
    %431 = vmatprep.subr.bf16.mxu0 0
    %432 = vmatpush1.bf16.msra.mxu0 %v411
    %433 = vmatprep.subr.bf16.mxu0 0
    %434 = vmatpush1.bf16.msra.mxu0 %v412
    %435 = vmatprep.subr.bf16.mxu0 0
    %436 = vmatpush1.bf16.msra.mxu0 %v413
    %437 = vmatprep.subr.bf16.mxu0 0
    %438 = vmatpush1.bf16.msra.mxu0 %v414
    %439 = vmatprep.subr.bf16.mxu0 0
    %440 = vmatpush1.bf16.msra.mxu0 0
    %441 = vmatprep.subr.bf16.mxu0 0
    %442 = vmatpush1.bf16.msra.mxu0 0
    %443 = vmatprep.subr.bf16.mxu0 0
    %444 = vmatpush1.bf16.msra.mxu0 0
    %445 = vmatprep.subr.bf16.mxu0 0
    %446 = vmatpush1.bf16.msra.mxu0 0
    %447 = vmatprep.subr.bf16.mxu0 0
    %448 = vmatpush1.bf16.msra.mxu0 0
    %449 = vmatprep.subr.bf16.mxu0 0
    %450 = vmatpush1.bf16.msra.mxu0 0
    %451 = vmatprep.subr.bf16.mxu0 0
    %452 = vmatpush1.bf16.msra.mxu0 0
    %453 = vmatprep.subr.bf16.mxu0 0
    %454 = vmatpush1.bf16.msra.mxu0 0
    %455 = vmatprep.mubr.bf16.mxu0 0
    %456 = vmatmul.mubr.bf16.gmra.mrb[0].mxu0 %v344
    %v457 = vpop.f32.mrb[0].mxu0
    %v458 = vadd.f32 %v373, %v457
    %v459 = vpop.f32.mrb[0].mxu0
    %v460 = vpop.f32.mrb[0].mxu0
    %v461 = vadd.f32 %v373, %v460
    %v462 = vpop.f32.mrb[0].mxu0
    %463 = vmatprep.mubr.bf16.mxu0 0
    %464 = vmatmul.mubr.bf16.gmra.mrb[0].mxu0 %v345
    %v465 = vpop.f32.mrb[0].mxu0
    %v466 = vadd.f32 %v373, %v465
    %v467 = vpop.f32.mrb[0].mxu0
    %v468 = vpop.f32.mrb[0].mxu0
    %v469 = vadd.f32 %v373, %v468
    %v470 = vpop.f32.mrb[0].mxu0
    %471 = vmatprep.mubr.bf16.mxu0 0
    %472 = vmatmul.mubr.bf16.gmra.mrb[0].mxu0 %v346
    %v473 = vpop.f32.mrb[0].mxu0
    %v474 = vadd.f32 %v373, %v473
    %v475 = vpop.f32.mrb[0].mxu0
    %v476 = vpop.f32.mrb[0].mxu0
    %v477 = vadd.f32 %v373, %v476
    %v478 = vpop.f32.mrb[0].mxu0
    %479 = vmatprep.mubr.bf16.mxu0 0
    %480 = vmatmul.mubr.bf16.gmra.mrb[0].mxu0 %v347
    %v481 = vpop.f32.mrb[0].mxu0
    %v482 = vadd.f32 %v373, %v481
    %v483 = vpop.f32.mrb[0].mxu0
    %v484 = vpop.f32.mrb[0].mxu0
    %v485 = vadd.f32 %v373, %v484
    %v486 = vpop.f32.mrb[0].mxu0
    %487 = vmatprep.mubr.bf16.mxu0 0
    %488 = vmatmul.mubr.bf16.gmra.mrb[0].mxu0 %v348
    %v489 = vpop.f32.mrb[0].mxu0
    %v490 = vadd.f32 %v373, %v489
    %v491 = vpop.f32.mrb[0].mxu0
    %v492 = vpop.f32.mrb[0].mxu0
    %v493 = vadd.f32 %v373, %v492
    %v494 = vpop.f32.mrb[0].mxu0
    %495 = vmatprep.mubr.bf16.mxu0 0
    %496 = vmatmul.mubr.bf16.gmra.mrb[0].mxu0 %v349
    %v497 = vpop.f32.mrb[0].mxu0
    %v498 = vadd.f32 %v373, %v497
    %v499 = vpop.f32.mrb[0].mxu0
    %v500 = vpop.f32.mrb[0].mxu0
    %v501 = vadd.f32 %v373, %v500
    %v502 = vpop.f32.mrb[0].mxu0
    %503 = vmatprep.mubr.bf16.mxu0 0
    %504 = vmatmul.mubr.bf16.gmra.mrb[0].mxu0 %v350
    %v505 = vpop.f32.mrb[0].mxu0
    %v506 = vadd.f32 %v373, %v505
    %v507 = vpop.f32.mrb[0].mxu0
    %v508 = vpop.f32.mrb[0].mxu0
    %v509 = vadd.f32 %v373, %v508
    %v510 = vpop.f32.mrb[0].mxu0
    %511 = vmatprep.mubr.bf16.mxu0 0
    %512 = vmatmul.mubr.bf16.gmra.mrb[0].mxu0 %v351
    %v513 = vpop.f32.mrb[0].mxu0
    %v514 = vadd.f32 %v373, %v513
    %v515 = vpop.f32.mrb[0].mxu0
    %v516 = vpop.f32.mrb[0].mxu0
    %v517 = vadd.f32 %v373, %v516
    %v518 = vpop.f32.mrb[0].mxu0
    %519 = vdwg.mxu0
    %v520 = vmax.f32 %v458, 0.0
    %v521 = vmax.f32 %v461, 0.0
    %v522 = vmax.f32 %v466, 0.0
    %v523 = vmax.f32 %v469, 0.0
    %v524 = vmax.f32 %v474, 0.0
    %v525 = vmax.f32 %v477, 0.0
    %v526 = vmax.f32 %v482, 0.0
    %v527 = vmax.f32 %v485, 0.0
    %v528 = vmax.f32 %v490, 0.0
    %v529 = vmax.f32 %v493, 0.0
    %v530 = vmax.f32 %v498, 0.0
    %v531 = vmax.f32 %v501, 0.0
    %v532 = vmax.f32 %v506, 0.0
    %v533 = vmax.f32 %v509, 0.0
    %v534 = vmax.f32 %v514, 0.0
    %v535 = vmax.f32 %v517, 0.0
    %v536 = vpack.c.bf16 %v521, %v520
    %v537 = vpack.c.bf16 %v523, %v522
    %v538 = vpack.c.bf16 %v525, %v524
    %v539 = vpack.c.bf16 %v527, %v526
    %v540 = vpack.c.bf16 %v529, %v528
    %v541 = vpack.c.bf16 %v531, %v530
    %v542 = vpack.c.bf16 %v533, %v532
    %v543 = vpack.c.bf16 %v535, %v534
    %v544 = vld [vmem:[%s4] sm:$0xf]
    %v545 = vld [vmem:[%s4 + $0x4] sm:$0xf]
    %v546 = vld [vmem:[%s4 + $0x8] sm:$0xf]
    %v547 = vld [vmem:[%s4 + $0xc] sm:$0xf]
    %v548 = vld [vmem:[%s4 + $0x10] sm:$0xf]
    %v549 = vld [vmem:[%s4 + $0x14] sm:$0xf]
    %v550 = vld [vmem:[%s4 + $0x18] sm:$0xf]
    %v551 = vld [vmem:[%s4 + $0x1c] sm:$0xf]
    %v552 = vld [vmem:[%s4 + $0x20] sm:$0xf]
    %v553 = vld [vmem:[%s4 + $0x24] sm:$0xf]
    %v554 = vld [vmem:[%s4 + $0x28] sm:$0xf]
    %v555 = vld [vmem:[%s4 + $0x2c] sm:$0xf]
    %v556 = vld [vmem:[%s4 + $0x30] sm:$0xf]
    %v557 = vld [vmem:[%s4 + $0x34] sm:$0xf]
    %v558 = vld [vmem:[%s4 + $0x38] sm:$0xf]
    %v559 = vld [vmem:[%s4 + $0x3c] sm:$0xf]
    %v560 = vld [vmem:[%s5] sm:$0x1]
    %v562 = vlaneseq
    %v563 = vshrl.u32 %v562, 7
    %v564 = vsub.s32 0, %v563
    %v565 = vrot.slane %v560, %v564
    %v583 = vunpack.c.l.b16 %v544
    %v584 = vunpack.c.l.b16 %v545
    %v585 = vunpack.c.l.b16 %v546
    %v586 = vunpack.c.l.b16 %v547
    %v587 = vunpack.c.l.b16 %v548
    %v588 = vunpack.c.l.b16 %v549
    %v589 = vunpack.c.l.b16 %v550
    %v590 = vunpack.c.l.b16 %v551
    %v591 = vunpack.c.l.b16 %v552
    %v592 = vunpack.c.l.b16 %v553
    %v593 = vunpack.c.l.b16 %v554
    %v594 = vunpack.c.l.b16 %v555
    %v595 = vunpack.c.l.b16 %v556
    %v596 = vunpack.c.l.b16 %v557
    %v597 = vunpack.c.l.b16 %v558
    %v598 = vunpack.c.l.b16 %v559
    %v599 = vpack.c.b16 %v584, %v583
    %v600 = vpack.c.b16 %v586, %v585
    %v601 = vpack.c.b16 %v588, %v587
    %v602 = vpack.c.b16 %v590, %v589
    %v603 = vpack.c.b16 %v592, %v591
    %v604 = vpack.c.b16 %v594, %v593
    %v605 = vpack.c.b16 %v596, %v595
    %v606 = vpack.c.b16 %v598, %v597
    %615 = vmatprep.subr.bf16.mxu0 0
    %616 = vmatpush1.bf16.msra.mxu0 %v599
    %617 = vmatprep.subr.bf16.mxu0 0
    %618 = vmatpush1.bf16.msra.mxu0 %v600
    %619 = vmatprep.subr.bf16.mxu0 0
    %620 = vmatpush1.bf16.msra.mxu0 %v601
    %621 = vmatprep.subr.bf16.mxu0 0
    %622 = vmatpush1.bf16.msra.mxu0 %v602
    %623 = vmatprep.subr.bf16.mxu0 0
    %624 = vmatpush1.bf16.msra.mxu0 %v603
    %625 = vmatprep.subr.bf16.mxu0 0
    %626 = vmatpush1.bf16.msra.mxu0 %v604
    %627 = vmatprep.subr.bf16.mxu0 0
    %628 = vmatpush1.bf16.msra.mxu0 %v605
    %629 = vmatprep.subr.bf16.mxu0 0
    %630 = vmatpush1.bf16.msra.mxu0 %v606
    %631 = vmatprep.subr.bf16.mxu0 0
    %632 = vmatpush1.bf16.msra.mxu0 0
    %633 = vmatprep.subr.bf16.mxu0 0
    %634 = vmatpush1.bf16.msra.mxu0 0
    %635 = vmatprep.subr.bf16.mxu0 0
    %636 = vmatpush1.bf16.msra.mxu0 0
    %637 = vmatprep.subr.bf16.mxu0 0
    %638 = vmatpush1.bf16.msra.mxu0 0
    %639 = vmatprep.subr.bf16.mxu0 0
    %640 = vmatpush1.bf16.msra.mxu0 0
    %641 = vmatprep.subr.bf16.mxu0 0
    %642 = vmatpush1.bf16.msra.mxu0 0
    %643 = vmatprep.subr.bf16.mxu0 0
    %644 = vmatpush1.bf16.msra.mxu0 0
    %645 = vmatprep.subr.bf16.mxu0 0
    %646 = vmatpush1.bf16.msra.mxu0 0
    %647 = vmatprep.mubr.bf16.mxu0 0
    %648 = vmatmul.mubr.bf16.gmra.mrb[0].mxu0 %v536
    %v649 = vpop.f32.mrb[0].mxu0
    %v650 = vadd.f32 %v565, %v649
    %v651 = vpop.f32.mrb[0].mxu0
    %v652 = vpop.f32.mrb[0].mxu0
    %v653 = vadd.f32 %v565, %v652
    %v654 = vpop.f32.mrb[0].mxu0
    %655 = vmatprep.mubr.bf16.mxu0 0
    %656 = vmatmul.mubr.bf16.gmra.mrb[0].mxu0 %v537
    %v657 = vpop.f32.mrb[0].mxu0
    %v658 = vadd.f32 %v565, %v657
    %v659 = vpop.f32.mrb[0].mxu0
    %v660 = vpop.f32.mrb[0].mxu0
    %v661 = vadd.f32 %v565, %v660
    %v662 = vpop.f32.mrb[0].mxu0
    %663 = vmatprep.mubr.bf16.mxu0 0
    %664 = vmatmul.mubr.bf16.gmra.mrb[0].mxu0 %v538
    %v665 = vpop.f32.mrb[0].mxu0
    %v666 = vadd.f32 %v565, %v665
    %v667 = vpop.f32.mrb[0].mxu0
    %v668 = vpop.f32.mrb[0].mxu0
    %v669 = vadd.f32 %v565, %v668
    %v670 = vpop.f32.mrb[0].mxu0
    %671 = vmatprep.mubr.bf16.mxu0 0
    %672 = vmatmul.mubr.bf16.gmra.mrb[0].mxu0 %v539
    %v673 = vpop.f32.mrb[0].mxu0
    %v674 = vadd.f32 %v565, %v673
    %v675 = vpop.f32.mrb[0].mxu0
    %v676 = vpop.f32.mrb[0].mxu0
    %v677 = vadd.f32 %v565, %v676
    %v678 = vpop.f32.mrb[0].mxu0
    %679 = vmatprep.mubr.bf16.mxu0 0
    %680 = vmatmul.mubr.bf16.gmra.mrb[0].mxu0 %v540
    %v681 = vpop.f32.mrb[0].mxu0
    %v682 = vadd.f32 %v565, %v681
    %v683 = vpop.f32.mrb[0].mxu0
    %v684 = vpop.f32.mrb[0].mxu0
    %v685 = vadd.f32 %v565, %v684
    %v686 = vpop.f32.mrb[0].mxu0
    %687 = vmatprep.mubr.bf16.mxu0 0
    %688 = vmatmul.mubr.bf16.gmra.mrb[0].mxu0 %v541
    %v689 = vpop.f32.mrb[0].mxu0
    %v690 = vadd.f32 %v565, %v689
    %v691 = vpop.f32.mrb[0].mxu0
    %v692 = vpop.f32.mrb[0].mxu0
    %v693 = vadd.f32 %v565, %v692
    %v694 = vpop.f32.mrb[0].mxu0
    %695 = vmatprep.mubr.bf16.mxu0 0
    %696 = vmatmul.mubr.bf16.gmra.mrb[0].mxu0 %v542
    %v697 = vpop.f32.mrb[0].mxu0
    %v698 = vadd.f32 %v565, %v697
    %v699 = vpop.f32.mrb[0].mxu0
    %v700 = vpop.f32.mrb[0].mxu0
    %v701 = vadd.f32 %v565, %v700
    %v702 = vpop.f32.mrb[0].mxu0
    %703 = vmatprep.mubr.bf16.mxu0 0
    %704 = vmatmul.mubr.bf16.gmra.mrb[0].mxu0 %v543
    %v705 = vpop.f32.mrb[0].mxu0
    %v706 = vadd.f32 %v565, %v705
    %v707 = vpop.f32.mrb[0].mxu0
    %v708 = vpop.f32.mrb[0].mxu0
    %v709 = vadd.f32 %v565, %v708
    %v710 = vpop.f32.mrb[0].mxu0
    %711 = vdwg.mxu0
    %v712 = vmax.f32 %v650, 0.0
    %v713 = vmax.f32 %v653, 0.0
    %v714 = vmax.f32 %v658, 0.0
    %v715 = vmax.f32 %v661, 0.0
    %v716 = vmax.f32 %v666, 0.0
    %v717 = vmax.f32 %v669, 0.0
    %v718 = vmax.f32 %v674, 0.0
    %v719 = vmax.f32 %v677, 0.0
    %v720 = vmax.f32 %v682, 0.0
    %v721 = vmax.f32 %v685, 0.0
    %v722 = vmax.f32 %v690, 0.0
    %v723 = vmax.f32 %v693, 0.0
    %v724 = vmax.f32 %v698, 0.0
    %v725 = vmax.f32 %v701, 0.0
    %v726 = vmax.f32 %v706, 0.0
    %v727 = vmax.f32 %v709, 0.0
    %v728 = vld [vmem:[%s6] sm:$0xff]
    %v729 = vld [vmem:[%s6 + $0x8] sm:$0xff]
    %v730 = vld [vmem:[%s6 + $0x10] sm:$0xff]
    %v731 = vld [vmem:[%s6 + $0x18] sm:$0xff]
    %v732 = vld [vmem:[%s6 + $0x20] sm:$0xff]
    %v733 = vld [vmem:[%s6 + $0x28] sm:$0xff]
    %v734 = vld [vmem:[%s6 + $0x30] sm:$0xff]
    %v735 = vld [vmem:[%s6 + $0x38] sm:$0xff]
    %v736 = vld [vmem:[%s6 + $0x40] sm:$0xff]
    %v737 = vld [vmem:[%s6 + $0x48] sm:$0xff]
    %v738 = vld [vmem:[%s6 + $0x50] sm:$0xff]
    %v739 = vld [vmem:[%s6 + $0x58] sm:$0xff]
    %v740 = vld [vmem:[%s6 + $0x60] sm:$0xff]
    %v741 = vld [vmem:[%s6 + $0x68] sm:$0xff]
    %v742 = vld [vmem:[%s6 + $0x70] sm:$0xff]
    %v743 = vld [vmem:[%s6 + $0x78] sm:$0xff]
    %745 = vset.pattern.permute.xlu0 0
    %746 = vperm.xlu0 %745, %v728
    %v747 = vpop.permute.xlu0 %746
    %750 = vset.pattern.permute.xlu0 0
    %751 = vperm.xlu0 %750, %v729
    %v752 = vpop.permute.xlu0 %751
    %755 = vset.pattern.permute.xlu0 0
    %756 = vperm.xlu0 %755, %v730
    %v757 = vpop.permute.xlu0 %756
    %760 = vset.pattern.permute.xlu0 0
    %761 = vperm.xlu0 %760, %v731
    %v762 = vpop.permute.xlu0 %761
    %765 = vset.pattern.permute.xlu0 0
    %766 = vperm.xlu0 %765, %v732
    %v767 = vpop.permute.xlu0 %766
    %770 = vset.pattern.permute.xlu0 0
    %771 = vperm.xlu0 %770, %v733
    %v772 = vpop.permute.xlu0 %771
    %775 = vset.pattern.permute.xlu0 0
    %776 = vperm.xlu0 %775, %v734
    %v777 = vpop.permute.xlu0 %776
    %780 = vset.pattern.permute.xlu0 0
    %781 = vperm.xlu0 %780, %v735
    %v782 = vpop.permute.xlu0 %781
    %785 = vset.pattern.permute.xlu0 0
    %786 = vperm.xlu0 %785, %v736
    %v787 = vpop.permute.xlu0 %786
    %790 = vset.pattern.permute.xlu0 0
    %791 = vperm.xlu0 %790, %v737
    %v792 = vpop.permute.xlu0 %791
    %795 = vset.pattern.permute.xlu0 0
    %796 = vperm.xlu0 %795, %v738
    %v797 = vpop.permute.xlu0 %796
    %800 = vset.pattern.permute.xlu0 0
    %801 = vperm.xlu0 %800, %v739
    %v802 = vpop.permute.xlu0 %801
    %805 = vset.pattern.permute.xlu0 0
    %806 = vperm.xlu0 %805, %v740
    %v807 = vpop.permute.xlu0 %806
    %810 = vset.pattern.permute.xlu0 0
    %811 = vperm.xlu0 %810, %v741
    %v812 = vpop.permute.xlu0 %811
    %815 = vset.pattern.permute.xlu0 0
    %816 = vperm.xlu0 %815, %v742
    %v817 = vpop.permute.xlu0 %816
    %820 = vset.pattern.permute.xlu0 0
    %821 = vperm.xlu0 %820, %v743
    %v822 = vpop.permute.xlu0 %821
    %v824 = vmul.f32 %v712, %v747
    %v825 = vmul.f32 %v713, %v752
    %v826 = vmul.f32 %v714, %v757
    %v827 = vmul.f32 %v715, %v762
    %v828 = vmul.f32 %v716, %v767
    %v829 = vmul.f32 %v717, %v772
    %v830 = vmul.f32 %v718, %v777
    %v831 = vmul.f32 %v719, %v782
    %v832 = vmul.f32 %v720, %v787
    %v833 = vmul.f32 %v721, %v792
    %v834 = vmul.f32 %v722, %v797
    %v835 = vmul.f32 %v723, %v802
    %v836 = vmul.f32 %v724, %v807
    %v837 = vmul.f32 %v725, %v812
    %v838 = vmul.f32 %v726, %v817
    %v839 = vmul.f32 %v727, %v822
    %v840 = vpack.c.bf16 %v825, %v824
    %v841 = vpack.c.bf16 %v827, %v826
    %v842 = vpack.c.bf16 %v829, %v828
    %v843 = vpack.c.bf16 %v831, %v830
    %v844 = vpack.c.bf16 %v833, %v832
    %v845 = vpack.c.bf16 %v835, %v834
    %v846 = vpack.c.bf16 %v837, %v836
    %v847 = vpack.c.bf16 %v839, %v838
    %v856 = vunpack.c.l.b16 %v840
    %v857 = vunpack.c.h.b16 %v840
    %v858 = vunpack.c.l.b16 %v841
    %v859 = vunpack.c.h.b16 %v841
    %v860 = vunpack.c.l.b16 %v842
    %v861 = vunpack.c.h.b16 %v842
    %v862 = vunpack.c.l.b16 %v843
    %v863 = vunpack.c.h.b16 %v843
    %v864 = vunpack.c.l.b16 %v844
    %v865 = vunpack.c.h.b16 %v844
    %v866 = vunpack.c.l.b16 %v845
    %v867 = vunpack.c.h.b16 %v845
    %v868 = vunpack.c.l.b16 %v846
    %v869 = vunpack.c.h.b16 %v846
    %v870 = vunpack.c.l.b16 %v847
    %v871 = vunpack.c.h.b16 %v847
    %v872 = vpack.c.b16 %v856, %v856
    %v873 = vpack.c.b16 %v857, %v857
    %v874 = vpack.c.b16 %v858, %v858
    %v875 = vpack.c.b16 %v859, %v859
    %v876 = vpack.c.b16 %v860, %v860
    %v877 = vpack.c.b16 %v861, %v861
    %v878 = vpack.c.b16 %v862, %v862
    %v879 = vpack.c.b16 %v863, %v863
    %v880 = vpack.c.b16 %v864, %v864
    %v881 = vpack.c.b16 %v865, %v865
    %v882 = vpack.c.b16 %v866, %v866
    %v883 = vpack.c.b16 %v867, %v867
    %v884 = vpack.c.b16 %v868, %v868
    %v885 = vpack.c.b16 %v869, %v869
    %v886 = vpack.c.b16 %v870, %v870
    %v887 = vpack.c.b16 %v871, %v871
    %904 = vst [vmem:[%s7] sm:$0xf] %v872
    %905 = vst [vmem:[%s7 + $0x4] sm:$0xf] %v873
    %906 = vst [vmem:[%s7 + $0x8] sm:$0xf] %v874
    %907 = vst [vmem:[%s7 + $0xc] sm:$0xf] %v875
    %908 = vst [vmem:[%s7 + $0x10] sm:$0xf] %v876
    %909 = vst [vmem:[%s7 + $0x14] sm:$0xf] %v877
    %910 = vst [vmem:[%s7 + $0x18] sm:$0xf] %v878
    %911 = vst [vmem:[%s7 + $0x1c] sm:$0xf] %v879
    %912 = vst [vmem:[%s7 + $0x20] sm:$0xf] %v880
    %913 = vst [vmem:[%s7 + $0x24] sm:$0xf] %v881
    %914 = vst [vmem:[%s7 + $0x28] sm:$0xf] %v882
    %915 = vst [vmem:[%s7 + $0x2c] sm:$0xf] %v883
    %916 = vst [vmem:[%s7 + $0x30] sm:$0xf] %v884
    %917 = vst [vmem:[%s7 + $0x34] sm:$0xf] %v885
    %918 = vst [vmem:[%s7 + $0x38] sm:$0xf] %v886
    %919 = vst [vmem:[%s7 + $0x3c] sm:$0xf] %v887
  $region37: #{gin_forward.4} parent=0 // pred_fallthru
    _
  // Predicated region
  $region38: #{gin_forward.4} parent=0 // pred_check
    _
  $region39: #{gin_forward.4} parent=0 // pred_check_branch
    %921 = sbr.rel (0) target = $region41
  $region40: #{gin_forward.4} parent=0 // pred_region
    _
  $region41: #{gin_forward.4} parent=0 // pred_fallthru
    _
  // Predicated region
  $region42: #{gin_forward.4} parent=0 // pred_check
    _
  $region43: #{gin_forward.4} parent=0 // pred_check_branch
    %923 = sbr.rel (0) target = $region45
  $region44: #{gin_forward.4} parent=0 // pred_region
    _
  $region45: #{gin_forward.4} parent=0 // pred_fallthru
    _

// kernel: gin_forward.6
$region0: #{gin_forward.6}
  #allocation0 [shape = 'u32[]', space=smem, size = 0x4, offset = 0x4, fixed_abs, tag = 'smem constant byte address 0x4 - core index']
  #allocation1 [shape = 'u32[144,128]{1,0:T(1,128)}', space=vmem, size = 0x12000, scoped, tag = 'internal scratch']
  #allocation2 [shape = 'f32[128,128]{1,0:T(8,128)}', space=vmem, size = 0x10000, scoped, tag = 'scratch operand']
  %s0 = inlined_call_operand.vmem [shape: bf16[128,128], index: 0, kind: input, shape index: {}]
  %s1 = inlined_call_operand.vmem [shape: bf16[128,128], index: 1, kind: input, shape index: {}]
  %s2 = inlined_call_operand.vmem [shape: bf16[128,128], index: 2, kind: input, shape index: {}]
  %s3 = inlined_call_operand.vmem [shape: f32[1,128], index: 3, kind: input, shape index: {}]
  %s4 = inlined_call_operand.vmem [shape: bf16[128,128], index: 4, kind: input, shape index: {}]
  %s5 = inlined_call_operand.vmem [shape: f32[1,128], index: 5, kind: input, shape index: {}]
  %s6 = inlined_call_operand.vmem [shape: f32[128,1], index: 6, kind: input, shape index: {}]
  %s7 = inlined_call_operand.vmem [shape: bf16[128,128], index: 7, kind: output, shape index: {}]
  %s8 = sld [smem:[#allocation0]]
  $region46: #{gin_forward.6} parent=0
    _
  %s10 = ssub.s32 1, %s8
  %s11 = scalar_select 0, %s10, %s8
  // Predicated region
  $region2: #{gin_forward.6} parent=0 // pred_check
    _
  $region3: #{gin_forward.6} parent=0 // pred_check_branch
    %13 = sbr.rel (0) target = $region5
  $region4: #{gin_forward.6} parent=0 // pred_region
    _
  $region5: #{gin_forward.6} parent=0 // pred_fallthru
    _
  // Predicated region
  $region6: #{gin_forward.6} parent=0 // pred_check
    _
  $region7: #{gin_forward.6} parent=0 // pred_check_branch
    %15 = sbr.rel (0) target = $region9
  $region8: #{gin_forward.6} parent=0 // pred_region
    _
  $region9: #{gin_forward.6} parent=0 // pred_fallthru
    _
  // Predicated region
  $region10: #{gin_forward.6} parent=0 // pred_check
    _
  $region11: #{gin_forward.6} parent=0 // pred_check_branch
    %17 = sbr.rel (0) target = $region13
  $region12: #{gin_forward.6} parent=0 // pred_region
    _
  $region13: #{gin_forward.6} parent=0 // pred_fallthru
    _
  // Predicated region
  $region14: #{gin_forward.6} parent=0 // pred_check
    _
  $region15: #{gin_forward.6} parent=0 // pred_check_branch
    %19 = sbr.rel (0) target = $region17
  $region16: #{gin_forward.6} parent=0 // pred_region
    _
  $region17: #{gin_forward.6} parent=0 // pred_fallthru
    _
  // Predicated region
  $region18: #{gin_forward.6} parent=0 // pred_check
    _
  $region19: #{gin_forward.6} parent=0 // pred_check_branch
    %21 = sbr.rel (0) target = $region21
  $region20: #{gin_forward.6} parent=0 // pred_region
    _
  $region21: #{gin_forward.6} parent=0 // pred_fallthru
    _
  // Predicated region
  $region22: #{gin_forward.6} parent=0 // pred_check
    _
  $region23: #{gin_forward.6} parent=0 // pred_check_branch
    %23 = sbr.rel (0) target = $region25
  $region24: #{gin_forward.6} parent=0 // pred_region
    _
  $region25: #{gin_forward.6} parent=0 // pred_fallthru
    _
  // Predicated region
  $region26: #{gin_forward.6} parent=0 // pred_check
    _
  $region27: #{gin_forward.6} parent=0 // pred_check_branch
    %25 = sbr.rel (0) target = $region29
  $region28: #{gin_forward.6} parent=0 // pred_region
    _
  $region29: #{gin_forward.6} parent=0 // pred_fallthru
    _
  %p27 = scmp.eq.s32.totalorder 0, 0
  // Predicated region
  $region30: #{gin_forward.6} parent=0 // pred_check
    %p28 = pneg %p27
  $region31: #{gin_forward.6} parent=0 // pred_check_branch
    %30 = sbr.rel (%p28) target = $region33
  $region32: #{gin_forward.6} parent=0 // pred_region
    %31 = vst [vmem:[#allocation2] sm:$0xff] 0.0
    %32 = vst [vmem:[#allocation2 + $0x8] sm:$0xff] 0.0
    %33 = vst [vmem:[#allocation2 + $0x10] sm:$0xff] 0.0
    %34 = vst [vmem:[#allocation2 + $0x18] sm:$0xff] 0.0
    %35 = vst [vmem:[#allocation2 + $0x20] sm:$0xff] 0.0
    %36 = vst [vmem:[#allocation2 + $0x28] sm:$0xff] 0.0
    %37 = vst [vmem:[#allocation2 + $0x30] sm:$0xff] 0.0
    %38 = vst [vmem:[#allocation2 + $0x38] sm:$0xff] 0.0
    %39 = vst [vmem:[#allocation2 + $0x40] sm:$0xff] 0.0
    %40 = vst [vmem:[#allocation2 + $0x48] sm:$0xff] 0.0
    %41 = vst [vmem:[#allocation2 + $0x50] sm:$0xff] 0.0
    %42 = vst [vmem:[#allocation2 + $0x58] sm:$0xff] 0.0
    %43 = vst [vmem:[#allocation2 + $0x60] sm:$0xff] 0.0
    %44 = vst [vmem:[#allocation2 + $0x68] sm:$0xff] 0.0
    %45 = vst [vmem:[#allocation2 + $0x70] sm:$0xff] 0.0
    %46 = vst [vmem:[#allocation2 + $0x78] sm:$0xff] 0.0
  $region33: #{gin_forward.6} parent=0 // pred_fallthru
    _
  %s47 = smul.u32 0, 128
  %v48 = vld [vmem:[#allocation2] sm:$0xff]
  %v49 = vld [vmem:[#allocation2 + $0x8] sm:$0xff]
  %v50 = vld [vmem:[#allocation2 + $0x10] sm:$0xff]
  %v51 = vld [vmem:[#allocation2 + $0x18] sm:$0xff]
  %v52 = vld [vmem:[#allocation2 + $0x20] sm:$0xff]
  %v53 = vld [vmem:[#allocation2 + $0x28] sm:$0xff]
  %v54 = vld [vmem:[#allocation2 + $0x30] sm:$0xff]
  %v55 = vld [vmem:[#allocation2 + $0x38] sm:$0xff]
  %v56 = vld [vmem:[#allocation2 + $0x40] sm:$0xff]
  %v57 = vld [vmem:[#allocation2 + $0x48] sm:$0xff]
  %v58 = vld [vmem:[#allocation2 + $0x50] sm:$0xff]
  %v59 = vld [vmem:[#allocation2 + $0x58] sm:$0xff]
  %v60 = vld [vmem:[#allocation2 + $0x60] sm:$0xff]
  %v61 = vld [vmem:[#allocation2 + $0x68] sm:$0xff]
  %v62 = vld [vmem:[#allocation2 + $0x70] sm:$0xff]
  %v63 = vld [vmem:[#allocation2 + $0x78] sm:$0xff]
  %v64 = vld [vmem:[%s1] sm:$0xf]
  %v65 = vld [vmem:[%s1 + $0x4] sm:$0xf]
  %v66 = vld [vmem:[%s1 + $0x8] sm:$0xf]
  %v67 = vld [vmem:[%s1 + $0xc] sm:$0xf]
  %v68 = vld [vmem:[%s1 + $0x10] sm:$0xf]
  %v69 = vld [vmem:[%s1 + $0x14] sm:$0xf]
  %v70 = vld [vmem:[%s1 + $0x18] sm:$0xf]
  %v71 = vld [vmem:[%s1 + $0x1c] sm:$0xf]
  %v72 = vld [vmem:[%s1 + $0x20] sm:$0xf]
  %v73 = vld [vmem:[%s1 + $0x24] sm:$0xf]
  %v74 = vld [vmem:[%s1 + $0x28] sm:$0xf]
  %v75 = vld [vmem:[%s1 + $0x2c] sm:$0xf]
  %v76 = vld [vmem:[%s1 + $0x30] sm:$0xf]
  %v77 = vld [vmem:[%s1 + $0x34] sm:$0xf]
  %v78 = vld [vmem:[%s1 + $0x38] sm:$0xf]
  %v79 = vld [vmem:[%s1 + $0x3c] sm:$0xf]
  %s80 = sshra.s32 %s47, 3
  %s81 = sand.u32 %s47, 7
  %s82 = smul.addr %s80, 4
  %s83 = scalar_lea.vmem %s0, %s82
  %v84 = vld [vmem:[%s83] sm:$0xf]
  %v85 = vld [vmem:[%s83 + $0x4] sm:$0xf]
  %v86 = vld [vmem:[%s83 + $0x8] sm:$0xf]
  %v87 = vld [vmem:[%s83 + $0xc] sm:$0xf]
  %v88 = vld [vmem:[%s83 + $0x10] sm:$0xf]
  %v89 = vld [vmem:[%s83 + $0x14] sm:$0xf]
  %v90 = vld [vmem:[%s83 + $0x18] sm:$0xf]
  %v91 = vld [vmem:[%s83 + $0x1c] sm:$0xf]
  %v92 = vld [vmem:[%s83 + $0x20] sm:$0xf]
  %v93 = vld [vmem:[%s83 + $0x24] sm:$0xf]
  %v94 = vld [vmem:[%s83 + $0x28] sm:$0xf]
  %v95 = vld [vmem:[%s83 + $0x2c] sm:$0xf]
  %v96 = vld [vmem:[%s83 + $0x30] sm:$0xf]
  %v97 = vld [vmem:[%s83 + $0x34] sm:$0xf]
  %v98 = vld [vmem:[%s83 + $0x38] sm:$0xf]
  %v99 = vld [vmem:[%s83 + $0x3c] sm:$0xf]
  %v116 = vunpack.c.l.b16 %v64
  %v117 = vunpack.c.l.b16 %v65
  %v118 = vunpack.c.l.b16 %v66
  %v119 = vunpack.c.l.b16 %v67
  %v120 = vunpack.c.l.b16 %v68
  %v121 = vunpack.c.l.b16 %v69
  %v122 = vunpack.c.l.b16 %v70
  %v123 = vunpack.c.l.b16 %v71
  %v124 = vunpack.c.l.b16 %v72
  %v125 = vunpack.c.l.b16 %v73
  %v126 = vunpack.c.l.b16 %v74
  %v127 = vunpack.c.l.b16 %v75
  %v128 = vunpack.c.l.b16 %v76
  %v129 = vunpack.c.l.b16 %v77
  %v130 = vunpack.c.l.b16 %v78
  %v131 = vunpack.c.l.b16 %v79
  %v132 = vpack.c.b16 %v117, %v116
  %v133 = vpack.c.b16 %v119, %v118
  %v134 = vpack.c.b16 %v121, %v120
  %v135 = vpack.c.b16 %v123, %v122
  %v136 = vpack.c.b16 %v125, %v124
  %v137 = vpack.c.b16 %v127, %v126
  %v138 = vpack.c.b16 %v129, %v128
  %v139 = vpack.c.b16 %v131, %v130
  %v164 = vunpack.c.l.b16 %v84
  %v165 = vunpack.c.l.b16 %v85
  %v166 = vunpack.c.l.b16 %v86
  %v167 = vunpack.c.l.b16 %v87
  %v168 = vunpack.c.l.b16 %v88
  %v169 = vunpack.c.l.b16 %v89
  %v170 = vunpack.c.l.b16 %v90
  %v171 = vunpack.c.l.b16 %v91
  %v172 = vunpack.c.l.b16 %v92
  %v173 = vunpack.c.l.b16 %v93
  %v174 = vunpack.c.l.b16 %v94
  %v175 = vunpack.c.l.b16 %v95
  %v176 = vunpack.c.l.b16 %v96
  %v177 = vunpack.c.l.b16 %v97
  %v178 = vunpack.c.l.b16 %v98
  %v179 = vunpack.c.l.b16 %v99
  %v180 = vpack.c.b16 %v165, %v164
  %v181 = vpack.c.b16 %v167, %v166
  %v182 = vpack.c.b16 %v169, %v168
  %v183 = vpack.c.b16 %v171, %v170
  %v184 = vpack.c.b16 %v173, %v172
  %v185 = vpack.c.b16 %v175, %v174
  %v186 = vpack.c.b16 %v177, %v176
  %v187 = vpack.c.b16 %v179, %v178
  %196 = vmatprep.subr.bf16.mxu0 0
  %197 = vmatpush1.bf16.msra.mxu0 %v180
  %198 = vmatprep.subr.bf16.mxu0 0
  %199 = vmatpush1.bf16.msra.mxu0 %v181
  %200 = vmatprep.subr.bf16.mxu0 0
  %201 = vmatpush1.bf16.msra.mxu0 %v182
  %202 = vmatprep.subr.bf16.mxu0 0
  %203 = vmatpush1.bf16.msra.mxu0 %v183
  %204 = vmatprep.subr.bf16.mxu0 0
  %205 = vmatpush1.bf16.msra.mxu0 %v184
  %206 = vmatprep.subr.bf16.mxu0 0
  %207 = vmatpush1.bf16.msra.mxu0 %v185
  %208 = vmatprep.subr.bf16.mxu0 0
  %209 = vmatpush1.bf16.msra.mxu0 %v186
  %210 = vmatprep.subr.bf16.mxu0 0
  %211 = vmatpush1.bf16.msra.mxu0 %v187
  %212 = vmatprep.subr.bf16.mxu0 0
  %213 = vmatpush1.bf16.msra.mxu0 0
  %214 = vmatprep.subr.bf16.mxu0 0
  %215 = vmatpush1.bf16.msra.mxu0 0
  %216 = vmatprep.subr.bf16.mxu0 0
  %217 = vmatpush1.bf16.msra.mxu0 0
  %218 = vmatprep.subr.bf16.mxu0 0
  %219 = vmatpush1.bf16.msra.mxu0 0
  %220 = vmatprep.subr.bf16.mxu0 0
  %221 = vmatpush1.bf16.msra.mxu0 0
  %222 = vmatprep.subr.bf16.mxu0 0
  %223 = vmatpush1.bf16.msra.mxu0 0
  %224 = vmatprep.subr.bf16.mxu0 0
  %225 = vmatpush1.bf16.msra.mxu0 0
  %226 = vmatprep.subr.bf16.mxu0 0
  %227 = vmatpush1.bf16.msra.mxu0 0
  %228 = vmatprep.mubr.bf16.mxu0 0
  %229 = vmatmul.mubr.bf16.gmra.mrb[0].mxu0 %v132
  %v230 = vpop.f32.mrb[0].mxu0
  %v231 = vadd.f32 0.0, %v230
  %v232 = vpop.f32.mrb[0].mxu0
  %v233 = vpop.f32.mrb[0].mxu0
  %v234 = vadd.f32 0.0, %v233
  %v235 = vpop.f32.mrb[0].mxu0
  %236 = vmatprep.mubr.bf16.mxu0 0
  %237 = vmatmul.mubr.bf16.gmra.mrb[0].mxu0 %v133
  %v238 = vpop.f32.mrb[0].mxu0
  %v239 = vadd.f32 0.0, %v238
  %v240 = vpop.f32.mrb[0].mxu0
  %v241 = vpop.f32.mrb[0].mxu0
  %v242 = vadd.f32 0.0, %v241
  %v243 = vpop.f32.mrb[0].mxu0
  %244 = vmatprep.mubr.bf16.mxu0 0
  %245 = vmatmul.mubr.bf16.gmra.mrb[0].mxu0 %v134
  %v246 = vpop.f32.mrb[0].mxu0
  %v247 = vadd.f32 0.0, %v246
  %v248 = vpop.f32.mrb[0].mxu0
  %v249 = vpop.f32.mrb[0].mxu0
  %v250 = vadd.f32 0.0, %v249
  %v251 = vpop.f32.mrb[0].mxu0
  %252 = vmatprep.mubr.bf16.mxu0 0
  %253 = vmatmul.mubr.bf16.gmra.mrb[0].mxu0 %v135
  %v254 = vpop.f32.mrb[0].mxu0
  %v255 = vadd.f32 0.0, %v254
  %v256 = vpop.f32.mrb[0].mxu0
  %v257 = vpop.f32.mrb[0].mxu0
  %v258 = vadd.f32 0.0, %v257
  %v259 = vpop.f32.mrb[0].mxu0
  %260 = vmatprep.mubr.bf16.mxu0 0
  %261 = vmatmul.mubr.bf16.gmra.mrb[0].mxu0 %v136
  %v262 = vpop.f32.mrb[0].mxu0
  %v263 = vadd.f32 0.0, %v262
  %v264 = vpop.f32.mrb[0].mxu0
  %v265 = vpop.f32.mrb[0].mxu0
  %v266 = vadd.f32 0.0, %v265
  %v267 = vpop.f32.mrb[0].mxu0
  %268 = vmatprep.mubr.bf16.mxu0 0
  %269 = vmatmul.mubr.bf16.gmra.mrb[0].mxu0 %v137
  %v270 = vpop.f32.mrb[0].mxu0
  %v271 = vadd.f32 0.0, %v270
  %v272 = vpop.f32.mrb[0].mxu0
  %v273 = vpop.f32.mrb[0].mxu0
  %v274 = vadd.f32 0.0, %v273
  %v275 = vpop.f32.mrb[0].mxu0
  %276 = vmatprep.mubr.bf16.mxu0 0
  %277 = vmatmul.mubr.bf16.gmra.mrb[0].mxu0 %v138
  %v278 = vpop.f32.mrb[0].mxu0
  %v279 = vadd.f32 0.0, %v278
  %v280 = vpop.f32.mrb[0].mxu0
  %v281 = vpop.f32.mrb[0].mxu0
  %v282 = vadd.f32 0.0, %v281
  %v283 = vpop.f32.mrb[0].mxu0
  %284 = vmatprep.mubr.bf16.mxu0 0
  %285 = vmatmul.mubr.bf16.gmra.mrb[0].mxu0 %v139
  %v286 = vpop.f32.mrb[0].mxu0
  %v287 = vadd.f32 0.0, %v286
  %v288 = vpop.f32.mrb[0].mxu0
  %v289 = vpop.f32.mrb[0].mxu0
  %v290 = vadd.f32 0.0, %v289
  %v291 = vpop.f32.mrb[0].mxu0
  %292 = vdwg.mxu0
  %v293 = vadd.f32 %v48, %v231
  %v294 = vadd.f32 %v49, %v234
  %v295 = vadd.f32 %v50, %v239
  %v296 = vadd.f32 %v51, %v242
  %v297 = vadd.f32 %v52, %v247
  %v298 = vadd.f32 %v53, %v250
  %v299 = vadd.f32 %v54, %v255
  %v300 = vadd.f32 %v55, %v258
  %v301 = vadd.f32 %v56, %v263
  %v302 = vadd.f32 %v57, %v266
  %v303 = vadd.f32 %v58, %v271
  %v304 = vadd.f32 %v59, %v274
  %v305 = vadd.f32 %v60, %v279
  %v306 = vadd.f32 %v61, %v282
  %v307 = vadd.f32 %v62, %v287
  %v308 = vadd.f32 %v63, %v290
  %309 = vst [vmem:[#allocation2] sm:$0xff] %v293
  %310 = vst [vmem:[#allocation2 + $0x8] sm:$0xff] %v294
  %311 = vst [vmem:[#allocation2 + $0x10] sm:$0xff] %v295
  %312 = vst [vmem:[#allocation2 + $0x18] sm:$0xff] %v296
  %313 = vst [vmem:[#allocation2 + $0x20] sm:$0xff] %v297
  %314 = vst [vmem:[#allocation2 + $0x28] sm:$0xff] %v298
  %315 = vst [vmem:[#allocation2 + $0x30] sm:$0xff] %v299
  %316 = vst [vmem:[#allocation2 + $0x38] sm:$0xff] %v300
  %317 = vst [vmem:[#allocation2 + $0x40] sm:$0xff] %v301
  %318 = vst [vmem:[#allocation2 + $0x48] sm:$0xff] %v302
  %319 = vst [vmem:[#allocation2 + $0x50] sm:$0xff] %v303
  %320 = vst [vmem:[#allocation2 + $0x58] sm:$0xff] %v304
  %321 = vst [vmem:[#allocation2 + $0x60] sm:$0xff] %v305
  %322 = vst [vmem:[#allocation2 + $0x68] sm:$0xff] %v306
  %323 = vst [vmem:[#allocation2 + $0x70] sm:$0xff] %v307
  %324 = vst [vmem:[#allocation2 + $0x78] sm:$0xff] %v308
  // Predicated region
  $region34: #{gin_forward.6} parent=0 // pred_check
    %p325 = pneg %p27
  $region35: #{gin_forward.6} parent=0 // pred_check_branch
    %327 = sbr.rel (%p325) target = $region37
  $region36: #{gin_forward.6} parent=0 // pred_region
    %v328 = vld [vmem:[#allocation2] sm:$0xff]
    %v329 = vld [vmem:[#allocation2 + $0x8] sm:$0xff]
    %v330 = vld [vmem:[#allocation2 + $0x10] sm:$0xff]
    %v331 = vld [vmem:[#allocation2 + $0x18] sm:$0xff]
    %v332 = vld [vmem:[#allocation2 + $0x20] sm:$0xff]
    %v333 = vld [vmem:[#allocation2 + $0x28] sm:$0xff]
    %v334 = vld [vmem:[#allocation2 + $0x30] sm:$0xff]
    %v335 = vld [vmem:[#allocation2 + $0x38] sm:$0xff]
    %v336 = vld [vmem:[#allocation2 + $0x40] sm:$0xff]
    %v337 = vld [vmem:[#allocation2 + $0x48] sm:$0xff]
    %v338 = vld [vmem:[#allocation2 + $0x50] sm:$0xff]
    %v339 = vld [vmem:[#allocation2 + $0x58] sm:$0xff]
    %v340 = vld [vmem:[#allocation2 + $0x60] sm:$0xff]
    %v341 = vld [vmem:[#allocation2 + $0x68] sm:$0xff]
    %v342 = vld [vmem:[#allocation2 + $0x70] sm:$0xff]
    %v343 = vld [vmem:[#allocation2 + $0x78] sm:$0xff]
    %v344 = vpack.c.bf16 %v329, %v328
    %v345 = vpack.c.bf16 %v331, %v330
    %v346 = vpack.c.bf16 %v333, %v332
    %v347 = vpack.c.bf16 %v335, %v334
    %v348 = vpack.c.bf16 %v337, %v336
    %v349 = vpack.c.bf16 %v339, %v338
    %v350 = vpack.c.bf16 %v341, %v340
    %v351 = vpack.c.bf16 %v343, %v342
    %v352 = vld [vmem:[%s2] sm:$0xf]
    %v353 = vld [vmem:[%s2 + $0x4] sm:$0xf]
    %v354 = vld [vmem:[%s2 + $0x8] sm:$0xf]
    %v355 = vld [vmem:[%s2 + $0xc] sm:$0xf]
    %v356 = vld [vmem:[%s2 + $0x10] sm:$0xf]
    %v357 = vld [vmem:[%s2 + $0x14] sm:$0xf]
    %v358 = vld [vmem:[%s2 + $0x18] sm:$0xf]
    %v359 = vld [vmem:[%s2 + $0x1c] sm:$0xf]
    %v360 = vld [vmem:[%s2 + $0x20] sm:$0xf]
    %v361 = vld [vmem:[%s2 + $0x24] sm:$0xf]
    %v362 = vld [vmem:[%s2 + $0x28] sm:$0xf]
    %v363 = vld [vmem:[%s2 + $0x2c] sm:$0xf]
    %v364 = vld [vmem:[%s2 + $0x30] sm:$0xf]
    %v365 = vld [vmem:[%s2 + $0x34] sm:$0xf]
    %v366 = vld [vmem:[%s2 + $0x38] sm:$0xf]
    %v367 = vld [vmem:[%s2 + $0x3c] sm:$0xf]
    %v368 = vld [vmem:[%s3] sm:$0x1]
    %v370 = vlaneseq
    %v371 = vshrl.u32 %v370, 7
    %v372 = vsub.s32 0, %v371
    %v373 = vrot.slane %v368, %v372
    %v391 = vunpack.c.l.b16 %v352
    %v392 = vunpack.c.l.b16 %v353
    %v393 = vunpack.c.l.b16 %v354
    %v394 = vunpack.c.l.b16 %v355
    %v395 = vunpack.c.l.b16 %v356
    %v396 = vunpack.c.l.b16 %v357
    %v397 = vunpack.c.l.b16 %v358
    %v398 = vunpack.c.l.b16 %v359
    %v399 = vunpack.c.l.b16 %v360
    %v400 = vunpack.c.l.b16 %v361
    %v401 = vunpack.c.l.b16 %v362
    %v402 = vunpack.c.l.b16 %v363
    %v403 = vunpack.c.l.b16 %v364
    %v404 = vunpack.c.l.b16 %v365
    %v405 = vunpack.c.l.b16 %v366
    %v406 = vunpack.c.l.b16 %v367
    %v407 = vpack.c.b16 %v392, %v391
    %v408 = vpack.c.b16 %v394, %v393
    %v409 = vpack.c.b16 %v396, %v395
    %v410 = vpack.c.b16 %v398, %v397
    %v411 = vpack.c.b16 %v400, %v399
    %v412 = vpack.c.b16 %v402, %v401
    %v413 = vpack.c.b16 %v404, %v403
    %v414 = vpack.c.b16 %v406, %v405
    %423 = vmatprep.subr.bf16.mxu0 0
    %424 = vmatpush1.bf16.msra.mxu0 %v407
    %425 = vmatprep.subr.bf16.mxu0 0
    %426 = vmatpush1.bf16.msra.mxu0 %v408
    %427 = vmatprep.subr.bf16.mxu0 0
    %428 = vmatpush1.bf16.msra.mxu0 %v409
    %429 = vmatprep.subr.bf16.mxu0 0
    %430 = vmatpush1.bf16.msra.mxu0 %v410
    %431 = vmatprep.subr.bf16.mxu0 0
    %432 = vmatpush1.bf16.msra.mxu0 %v411
    %433 = vmatprep.subr.bf16.mxu0 0
    %434 = vmatpush1.bf16.msra.mxu0 %v412
    %435 = vmatprep.subr.bf16.mxu0 0
    %436 = vmatpush1.bf16.msra.mxu0 %v413
    %437 = vmatprep.subr.bf16.mxu0 0
    %438 = vmatpush1.bf16.msra.mxu0 %v414
    %439 = vmatprep.subr.bf16.mxu0 0
    %440 = vmatpush1.bf16.msra.mxu0 0
    %441 = vmatprep.subr.bf16.mxu0 0
    %442 = vmatpush1.bf16.msra.mxu0 0
    %443 = vmatprep.subr.bf16.mxu0 0
    %444 = vmatpush1.bf16.msra.mxu0 0
    %445 = vmatprep.subr.bf16.mxu0 0
    %446 = vmatpush1.bf16.msra.mxu0 0
    %447 = vmatprep.subr.bf16.mxu0 0
    %448 = vmatpush1.bf16.msra.mxu0 0
    %449 = vmatprep.subr.bf16.mxu0 0
    %450 = vmatpush1.bf16.msra.mxu0 0
    %451 = vmatprep.subr.bf16.mxu0 0
    %452 = vmatpush1.bf16.msra.mxu0 0
    %453 = vmatprep.subr.bf16.mxu0 0
    %454 = vmatpush1.bf16.msra.mxu0 0
    %455 = vmatprep.mubr.bf16.mxu0 0
    %456 = vmatmul.mubr.bf16.gmra.mrb[0].mxu0 %v344
    %v457 = vpop.f32.mrb[0].mxu0
    %v458 = vadd.f32 %v373, %v457
    %v459 = vpop.f32.mrb[0].mxu0
    %v460 = vpop.f32.mrb[0].mxu0
    %v461 = vadd.f32 %v373, %v460
    %v462 = vpop.f32.mrb[0].mxu0
    %463 = vmatprep.mubr.bf16.mxu0 0
    %464 = vmatmul.mubr.bf16.gmra.mrb[0].mxu0 %v345
    %v465 = vpop.f32.mrb[0].mxu0
    %v466 = vadd.f32 %v373, %v465
    %v467 = vpop.f32.mrb[0].mxu0
    %v468 = vpop.f32.mrb[0].mxu0
    %v469 = vadd.f32 %v373, %v468
    %v470 = vpop.f32.mrb[0].mxu0
    %471 = vmatprep.mubr.bf16.mxu0 0
    %472 = vmatmul.mubr.bf16.gmra.mrb[0].mxu0 %v346
    %v473 = vpop.f32.mrb[0].mxu0
    %v474 = vadd.f32 %v373, %v473
    %v475 = vpop.f32.mrb[0].mxu0
    %v476 = vpop.f32.mrb[0].mxu0
    %v477 = vadd.f32 %v373, %v476
    %v478 = vpop.f32.mrb[0].mxu0
    %479 = vmatprep.mubr.bf16.mxu0 0
    %480 = vmatmul.mubr.bf16.gmra.mrb[0].mxu0 %v347
    %v481 = vpop.f32.mrb[0].mxu0
    %v482 = vadd.f32 %v373, %v481
    %v483 = vpop.f32.mrb[0].mxu0
    %v484 = vpop.f32.mrb[0].mxu0
    %v485 = vadd.f32 %v373, %v484
    %v486 = vpop.f32.mrb[0].mxu0
    %487 = vmatprep.mubr.bf16.mxu0 0
    %488 = vmatmul.mubr.bf16.gmra.mrb[0].mxu0 %v348
    %v489 = vpop.f32.mrb[0].mxu0
    %v490 = vadd.f32 %v373, %v489
    %v491 = vpop.f32.mrb[0].mxu0
    %v492 = vpop.f32.mrb[0].mxu0
    %v493 = vadd.f32 %v373, %v492
    %v494 = vpop.f32.mrb[0].mxu0
    %495 = vmatprep.mubr.bf16.mxu0 0
    %496 = vmatmul.mubr.bf16.gmra.mrb[0].mxu0 %v349
    %v497 = vpop.f32.mrb[0].mxu0
    %v498 = vadd.f32 %v373, %v497
    %v499 = vpop.f32.mrb[0].mxu0
    %v500 = vpop.f32.mrb[0].mxu0
    %v501 = vadd.f32 %v373, %v500
    %v502 = vpop.f32.mrb[0].mxu0
    %503 = vmatprep.mubr.bf16.mxu0 0
    %504 = vmatmul.mubr.bf16.gmra.mrb[0].mxu0 %v350
    %v505 = vpop.f32.mrb[0].mxu0
    %v506 = vadd.f32 %v373, %v505
    %v507 = vpop.f32.mrb[0].mxu0
    %v508 = vpop.f32.mrb[0].mxu0
    %v509 = vadd.f32 %v373, %v508
    %v510 = vpop.f32.mrb[0].mxu0
    %511 = vmatprep.mubr.bf16.mxu0 0
    %512 = vmatmul.mubr.bf16.gmra.mrb[0].mxu0 %v351
    %v513 = vpop.f32.mrb[0].mxu0
    %v514 = vadd.f32 %v373, %v513
    %v515 = vpop.f32.mrb[0].mxu0
    %v516 = vpop.f32.mrb[0].mxu0
    %v517 = vadd.f32 %v373, %v516
    %v518 = vpop.f32.mrb[0].mxu0
    %519 = vdwg.mxu0
    %v520 = vmax.f32 %v458, 0.0
    %v521 = vmax.f32 %v461, 0.0
    %v522 = vmax.f32 %v466, 0.0
    %v523 = vmax.f32 %v469, 0.0
    %v524 = vmax.f32 %v474, 0.0
    %v525 = vmax.f32 %v477, 0.0
    %v526 = vmax.f32 %v482, 0.0
    %v527 = vmax.f32 %v485, 0.0
    %v528 = vmax.f32 %v490, 0.0
    %v529 = vmax.f32 %v493, 0.0
    %v530 = vmax.f32 %v498, 0.0
    %v531 = vmax.f32 %v501, 0.0
    %v532 = vmax.f32 %v506, 0.0
    %v533 = vmax.f32 %v509, 0.0
    %v534 = vmax.f32 %v514, 0.0
    %v535 = vmax.f32 %v517, 0.0
    %v536 = vpack.c.bf16 %v521, %v520
    %v537 = vpack.c.bf16 %v523, %v522
    %v538 = vpack.c.bf16 %v525, %v524
    %v539 = vpack.c.bf16 %v527, %v526
    %v540 = vpack.c.bf16 %v529, %v528
    %v541 = vpack.c.bf16 %v531, %v530
    %v542 = vpack.c.bf16 %v533, %v532
    %v543 = vpack.c.bf16 %v535, %v534
    %v544 = vld [vmem:[%s4] sm:$0xf]
    %v545 = vld [vmem:[%s4 + $0x4] sm:$0xf]
    %v546 = vld [vmem:[%s4 + $0x8] sm:$0xf]
    %v547 = vld [vmem:[%s4 + $0xc] sm:$0xf]
    %v548 = vld [vmem:[%s4 + $0x10] sm:$0xf]
    %v549 = vld [vmem:[%s4 + $0x14] sm:$0xf]
    %v550 = vld [vmem:[%s4 + $0x18] sm:$0xf]
    %v551 = vld [vmem:[%s4 + $0x1c] sm:$0xf]
    %v552 = vld [vmem:[%s4 + $0x20] sm:$0xf]
    %v553 = vld [vmem:[%s4 + $0x24] sm:$0xf]
    %v554 = vld [vmem:[%s4 + $0x28] sm:$0xf]
    %v555 = vld [vmem:[%s4 + $0x2c] sm:$0xf]
    %v556 = vld [vmem:[%s4 + $0x30] sm:$0xf]
    %v557 = vld [vmem:[%s4 + $0x34] sm:$0xf]
    %v558 = vld [vmem:[%s4 + $0x38] sm:$0xf]
    %v559 = vld [vmem:[%s4 + $0x3c] sm:$0xf]
    %v560 = vld [vmem:[%s5] sm:$0x1]
    %v562 = vlaneseq
    %v563 = vshrl.u32 %v562, 7
    %v564 = vsub.s32 0, %v563
    %v565 = vrot.slane %v560, %v564
    %v583 = vunpack.c.l.b16 %v544
    %v584 = vunpack.c.l.b16 %v545
    %v585 = vunpack.c.l.b16 %v546
    %v586 = vunpack.c.l.b16 %v547
    %v587 = vunpack.c.l.b16 %v548
    %v588 = vunpack.c.l.b16 %v549
    %v589 = vunpack.c.l.b16 %v550
    %v590 = vunpack.c.l.b16 %v551
    %v591 = vunpack.c.l.b16 %v552
    %v592 = vunpack.c.l.b16 %v553
    %v593 = vunpack.c.l.b16 %v554
    %v594 = vunpack.c.l.b16 %v555
    %v595 = vunpack.c.l.b16 %v556
    %v596 = vunpack.c.l.b16 %v557
    %v597 = vunpack.c.l.b16 %v558
    %v598 = vunpack.c.l.b16 %v559
    %v599 = vpack.c.b16 %v584, %v583
    %v600 = vpack.c.b16 %v586, %v585
    %v601 = vpack.c.b16 %v588, %v587
    %v602 = vpack.c.b16 %v590, %v589
    %v603 = vpack.c.b16 %v592, %v591
    %v604 = vpack.c.b16 %v594, %v593
    %v605 = vpack.c.b16 %v596, %v595
    %v606 = vpack.c.b16 %v598, %v597
    %615 = vmatprep.subr.bf16.mxu0 0
    %616 = vmatpush1.bf16.msra.mxu0 %v599
    %617 = vmatprep.subr.bf16.mxu0 0
    %618 = vmatpush1.bf16.msra.mxu0 %v600
    %619 = vmatprep.subr.bf16.mxu0 0
    %620 = vmatpush1.bf16.msra.mxu0 %v601
    %621 = vmatprep.subr.bf16.mxu0 0
    %622 = vmatpush1.bf16.msra.mxu0 %v602
    %623 = vmatprep.subr.bf16.mxu0 0
    %624 = vmatpush1.bf16.msra.mxu0 %v603
    %625 = vmatprep.subr.bf16.mxu0 0
    %626 = vmatpush1.bf16.msra.mxu0 %v604
    %627 = vmatprep.subr.bf16.mxu0 0
    %628 = vmatpush1.bf16.msra.mxu0 %v605
    %629 = vmatprep.subr.bf16.mxu0 0
    %630 = vmatpush1.bf16.msra.mxu0 %v606
    %631 = vmatprep.subr.bf16.mxu0 0
    %632 = vmatpush1.bf16.msra.mxu0 0
    %633 = vmatprep.subr.bf16.mxu0 0
    %634 = vmatpush1.bf16.msra.mxu0 0
    %635 = vmatprep.subr.bf16.mxu0 0
    %636 = vmatpush1.bf16.msra.mxu0 0
    %637 = vmatprep.subr.bf16.mxu0 0
    %638 = vmatpush1.bf16.msra.mxu0 0
    %639 = vmatprep.subr.bf16.mxu0 0
    %640 = vmatpush1.bf16.msra.mxu0 0
    %641 = vmatprep.subr.bf16.mxu0 0
    %642 = vmatpush1.bf16.msra.mxu0 0
    %643 = vmatprep.subr.bf16.mxu0 0
    %644 = vmatpush1.bf16.msra.mxu0 0
    %645 = vmatprep.subr.bf16.mxu0 0
    %646 = vmatpush1.bf16.msra.mxu0 0
    %647 = vmatprep.mubr.bf16.mxu0 0
    %648 = vmatmul.mubr.bf16.gmra.mrb[0].mxu0 %v536
    %v649 = vpop.f32.mrb[0].mxu0
    %v650 = vadd.f32 %v565, %v649
    %v651 = vpop.f32.mrb[0].mxu0
    %v652 = vpop.f32.mrb[0].mxu0
    %v653 = vadd.f32 %v565, %v652
    %v654 = vpop.f32.mrb[0].mxu0
    %655 = vmatprep.mubr.bf16.mxu0 0
    %656 = vmatmul.mubr.bf16.gmra.mrb[0].mxu0 %v537
    %v657 = vpop.f32.mrb[0].mxu0
    %v658 = vadd.f32 %v565, %v657
    %v659 = vpop.f32.mrb[0].mxu0
    %v660 = vpop.f32.mrb[0].mxu0
    %v661 = vadd.f32 %v565, %v660
    %v662 = vpop.f32.mrb[0].mxu0
    %663 = vmatprep.mubr.bf16.mxu0 0
    %664 = vmatmul.mubr.bf16.gmra.mrb[0].mxu0 %v538
    %v665 = vpop.f32.mrb[0].mxu0
    %v666 = vadd.f32 %v565, %v665
    %v667 = vpop.f32.mrb[0].mxu0
    %v668 = vpop.f32.mrb[0].mxu0
    %v669 = vadd.f32 %v565, %v668
    %v670 = vpop.f32.mrb[0].mxu0
    %671 = vmatprep.mubr.bf16.mxu0 0
    %672 = vmatmul.mubr.bf16.gmra.mrb[0].mxu0 %v539
    %v673 = vpop.f32.mrb[0].mxu0
    %v674 = vadd.f32 %v565, %v673
    %v675 = vpop.f32.mrb[0].mxu0
    %v676 = vpop.f32.mrb[0].mxu0
    %v677 = vadd.f32 %v565, %v676
    %v678 = vpop.f32.mrb[0].mxu0
    %679 = vmatprep.mubr.bf16.mxu0 0
    %680 = vmatmul.mubr.bf16.gmra.mrb[0].mxu0 %v540
    %v681 = vpop.f32.mrb[0].mxu0
    %v682 = vadd.f32 %v565, %v681
    %v683 = vpop.f32.mrb[0].mxu0
    %v684 = vpop.f32.mrb[0].mxu0
    %v685 = vadd.f32 %v565, %v684
    %v686 = vpop.f32.mrb[0].mxu0
    %687 = vmatprep.mubr.bf16.mxu0 0
    %688 = vmatmul.mubr.bf16.gmra.mrb[0].mxu0 %v541
    %v689 = vpop.f32.mrb[0].mxu0
    %v690 = vadd.f32 %v565, %v689
    %v691 = vpop.f32.mrb[0].mxu0
    %v692 = vpop.f32.mrb[0].mxu0
    %v693 = vadd.f32 %v565, %v692
    %v694 = vpop.f32.mrb[0].mxu0
    %695 = vmatprep.mubr.bf16.mxu0 0
    %696 = vmatmul.mubr.bf16.gmra.mrb[0].mxu0 %v542
    %v697 = vpop.f32.mrb[0].mxu0
    %v698 = vadd.f32 %v565, %v697
    %v699 = vpop.f32.mrb[0].mxu0
    %v700 = vpop.f32.mrb[0].mxu0
    %v701 = vadd.f32 %v565, %v700
    %v702 = vpop.f32.mrb[0].mxu0
    %703 = vmatprep.mubr.bf16.mxu0 0
    %704 = vmatmul.mubr.bf16.gmra.mrb[0].mxu0 %v543
    %v705 = vpop.f32.mrb[0].mxu0
    %v706 = vadd.f32 %v565, %v705
    %v707 = vpop.f32.mrb[0].mxu0
    %v708 = vpop.f32.mrb[0].mxu0
    %v709 = vadd.f32 %v565, %v708
    %v710 = vpop.f32.mrb[0].mxu0
    %711 = vdwg.mxu0
    %v712 = vld [vmem:[%s6] sm:$0xff]
    %v713 = vld [vmem:[%s6 + $0x8] sm:$0xff]
    %v714 = vld [vmem:[%s6 + $0x10] sm:$0xff]
    %v715 = vld [vmem:[%s6 + $0x18] sm:$0xff]
    %v716 = vld [vmem:[%s6 + $0x20] sm:$0xff]
    %v717 = vld [vmem:[%s6 + $0x28] sm:$0xff]
    %v718 = vld [vmem:[%s6 + $0x30] sm:$0xff]
    %v719 = vld [vmem:[%s6 + $0x38] sm:$0xff]
    %v720 = vld [vmem:[%s6 + $0x40] sm:$0xff]
    %v721 = vld [vmem:[%s6 + $0x48] sm:$0xff]
    %v722 = vld [vmem:[%s6 + $0x50] sm:$0xff]
    %v723 = vld [vmem:[%s6 + $0x58] sm:$0xff]
    %v724 = vld [vmem:[%s6 + $0x60] sm:$0xff]
    %v725 = vld [vmem:[%s6 + $0x68] sm:$0xff]
    %v726 = vld [vmem:[%s6 + $0x70] sm:$0xff]
    %v727 = vld [vmem:[%s6 + $0x78] sm:$0xff]
    %729 = vset.pattern.permute.xlu0 0
    %730 = vperm.xlu0 %729, %v712
    %v731 = vpop.permute.xlu0 %730
    %734 = vset.pattern.permute.xlu0 0
    %735 = vperm.xlu0 %734, %v713
    %v736 = vpop.permute.xlu0 %735
    %739 = vset.pattern.permute.xlu0 0
    %740 = vperm.xlu0 %739, %v714
    %v741 = vpop.permute.xlu0 %740
    %744 = vset.pattern.permute.xlu0 0
    %745 = vperm.xlu0 %744, %v715
    %v746 = vpop.permute.xlu0 %745
    %749 = vset.pattern.permute.xlu0 0
    %750 = vperm.xlu0 %749, %v716
    %v751 = vpop.permute.xlu0 %750
    %754 = vset.pattern.permute.xlu0 0
    %755 = vperm.xlu0 %754, %v717
    %v756 = vpop.permute.xlu0 %755
    %759 = vset.pattern.permute.xlu0 0
    %760 = vperm.xlu0 %759, %v718
    %v761 = vpop.permute.xlu0 %760
    %764 = vset.pattern.permute.xlu0 0
    %765 = vperm.xlu0 %764, %v719
    %v766 = vpop.permute.xlu0 %765
    %769 = vset.pattern.permute.xlu0 0
    %770 = vperm.xlu0 %769, %v720
    %v771 = vpop.permute.xlu0 %770
    %774 = vset.pattern.permute.xlu0 0
    %775 = vperm.xlu0 %774, %v721
    %v776 = vpop.permute.xlu0 %775
    %779 = vset.pattern.permute.xlu0 0
    %780 = vperm.xlu0 %779, %v722
    %v781 = vpop.permute.xlu0 %780
    %784 = vset.pattern.permute.xlu0 0
    %785 = vperm.xlu0 %784, %v723
    %v786 = vpop.permute.xlu0 %785
    %789 = vset.pattern.permute.xlu0 0
    %790 = vperm.xlu0 %789, %v724
    %v791 = vpop.permute.xlu0 %790
    %794 = vset.pattern.permute.xlu0 0
    %795 = vperm.xlu0 %794, %v725
    %v796 = vpop.permute.xlu0 %795
    %799 = vset.pattern.permute.xlu0 0
    %800 = vperm.xlu0 %799, %v726
    %v801 = vpop.permute.xlu0 %800
    %804 = vset.pattern.permute.xlu0 0
    %805 = vperm.xlu0 %804, %v727
    %v806 = vpop.permute.xlu0 %805
    %v808 = vmul.f32 %v650, %v731
    %v809 = vmul.f32 %v653, %v736
    %v810 = vmul.f32 %v658, %v741
    %v811 = vmul.f32 %v661, %v746
    %v812 = vmul.f32 %v666, %v751
    %v813 = vmul.f32 %v669, %v756
    %v814 = vmul.f32 %v674, %v761
    %v815 = vmul.f32 %v677, %v766
    %v816 = vmul.f32 %v682, %v771
    %v817 = vmul.f32 %v685, %v776
    %v818 = vmul.f32 %v690, %v781
    %v819 = vmul.f32 %v693, %v786
    %v820 = vmul.f32 %v698, %v791
    %v821 = vmul.f32 %v701, %v796
    %v822 = vmul.f32 %v706, %v801
    %v823 = vmul.f32 %v709, %v806
    %v824 = vpack.c.bf16 %v809, %v808
    %v825 = vpack.c.bf16 %v811, %v810
    %v826 = vpack.c.bf16 %v813, %v812
    %v827 = vpack.c.bf16 %v815, %v814
    %v828 = vpack.c.bf16 %v817, %v816
    %v829 = vpack.c.bf16 %v819, %v818
    %v830 = vpack.c.bf16 %v821, %v820
    %v831 = vpack.c.bf16 %v823, %v822
    %v840 = vunpack.c.l.b16 %v824
    %v841 = vunpack.c.h.b16 %v824
    %v842 = vunpack.c.l.b16 %v825
    %v843 = vunpack.c.h.b16 %v825
    %v844 = vunpack.c.l.b16 %v826
    %v845 = vunpack.c.h.b16 %v826
    %v846 = vunpack.c.l.b16 %v827
    %v847 = vunpack.c.h.b16 %v827
    %v848 = vunpack.c.l.b16 %v828
    %v849 = vunpack.c.h.b16 %v828
    %v850 = vunpack.c.l.b16 %v829
    %v851 = vunpack.c.h.b16 %v829
    %v852 = vunpack.c.l.b16 %v830
    %v853 = vunpack.c.h.b16 %v830
    %v854 = vunpack.c.l.b16 %v831
    %v855 = vunpack.c.h.b16 %v831
    %v856 = vpack.c.b16 %v840, %v840
    %v857 = vpack.c.b16 %v841, %v841
    %v858 = vpack.c.b16 %v842, %v842
    %v859 = vpack.c.b16 %v843, %v843
    %v860 = vpack.c.b16 %v844, %v844
    %v861 = vpack.c.b16 %v845, %v845
    %v862 = vpack.c.b16 %v846, %v846
    %v863 = vpack.c.b16 %v847, %v847
    %v864 = vpack.c.b16 %v848, %v848
    %v865 = vpack.c.b16 %v849, %v849
    %v866 = vpack.c.b16 %v850, %v850
    %v867 = vpack.c.b16 %v851, %v851
    %v868 = vpack.c.b16 %v852, %v852
    %v869 = vpack.c.b16 %v853, %v853
    %v870 = vpack.c.b16 %v854, %v854
    %v871 = vpack.c.b16 %v855, %v855
    %888 = vst [vmem:[%s7] sm:$0xf] %v856
    %889 = vst [vmem:[%s7 + $0x4] sm:$0xf] %v857
    %890 = vst [vmem:[%s7 + $0x8] sm:$0xf] %v858
    %891 = vst [vmem:[%s7 + $0xc] sm:$0xf] %v859
    %892 = vst [vmem:[%s7 + $0x10] sm:$0xf] %v860
    %893 = vst [vmem:[%s7 + $0x14] sm:$0xf] %v861
    %894 = vst [vmem:[%s7 + $0x18] sm:$0xf] %v862
    %895 = vst [vmem:[%s7 + $0x1c] sm:$0xf] %v863
    %896 = vst [vmem:[%s7 + $0x20] sm:$0xf] %v864
    %897 = vst [vmem:[%s7 + $0x24] sm:$0xf] %v865
    %898 = vst [vmem:[%s7 + $0x28] sm:$0xf] %v866
    %899 = vst [vmem:[%s7 + $0x2c] sm:$0xf] %v867
    %900 = vst [vmem:[%s7 + $0x30] sm:$0xf] %v868
    %901 = vst [vmem:[%s7 + $0x34] sm:$0xf] %v869
    %902 = vst [vmem:[%s7 + $0x38] sm:$0xf] %v870
    %903 = vst [vmem:[%s7 + $0x3c] sm:$0xf] %v871
  $region37: #{gin_forward.6} parent=0 // pred_fallthru
    _
  // Predicated region
  $region38: #{gin_forward.6} parent=0 // pred_check
    _
  $region39: #{gin_forward.6} parent=0 // pred_check_branch
    %905 = sbr.rel (0) target = $region41
  $region40: #{gin_forward.6} parent=0 // pred_region
    _
  $region41: #{gin_forward.6} parent=0 // pred_fallthru
    _
  // Predicated region
  $region42: #{gin_forward.6} parent=0 // pred_check
    _
  $region43: #{gin_forward.6} parent=0 // pred_check_branch
    %907 = sbr.rel (0) target = $region45
  $region44: #{gin_forward.6} parent=0 // pred_region
    _
  $region45: #{gin_forward.6} parent=0 // pred_fallthru
    _

// kernel: gin_forward.7
$region0: #{gin_forward.7}
  #allocation0 [shape = 'u32[]', space=smem, size = 0x4, offset = 0x4, fixed_abs, tag = 'smem constant byte address 0x4 - core index']
  #allocation1 [shape = 'u32[144,128]{1,0:T(1,128)}', space=vmem, size = 0x12000, scoped, tag = 'internal scratch']
  #allocation2 [shape = 'f32[8,128]{1,0:T(8,128)}', space=vmem, size = 0x1000, scoped, tag = 'scratch operand']
  %s0 = inlined_call_operand.vmem [shape: bf16[8,128], index: 0, kind: input, shape index: {}]
  %s1 = inlined_call_operand.vmem [shape: bf16[128,128], index: 1, kind: input, shape index: {}]
  %s2 = inlined_call_operand.vmem [shape: bf16[128,128], index: 2, kind: input, shape index: {}]
  %s3 = inlined_call_operand.vmem [shape: f32[1,128], index: 3, kind: input, shape index: {}]
  %s4 = inlined_call_operand.vmem [shape: bf16[128,128], index: 4, kind: input, shape index: {}]
  %s5 = inlined_call_operand.vmem [shape: f32[1,128], index: 5, kind: input, shape index: {}]
  %s6 = inlined_call_operand.vmem [shape: f32[8,128], index: 6, kind: output, shape index: {}]
  %s7 = sld [smem:[#allocation0]]
  $region42: #{gin_forward.7} parent=0
    _
  %s9 = ssub.s32 1, %s7
  %s10 = scalar_select 0, %s9, %s7
  // Predicated region
  $region2: #{gin_forward.7} parent=0 // pred_check
    _
  $region3: #{gin_forward.7} parent=0 // pred_check_branch
    %12 = sbr.rel (0) target = $region5
  $region4: #{gin_forward.7} parent=0 // pred_region
    _
  $region5: #{gin_forward.7} parent=0 // pred_fallthru
    _
  // Predicated region
  $region6: #{gin_forward.7} parent=0 // pred_check
    _
  $region7: #{gin_forward.7} parent=0 // pred_check_branch
    %14 = sbr.rel (0) target = $region9
  $region8: #{gin_forward.7} parent=0 // pred_region
    _
  $region9: #{gin_forward.7} parent=0 // pred_fallthru
    _
  // Predicated region
  $region10: #{gin_forward.7} parent=0 // pred_check
    _
  $region11: #{gin_forward.7} parent=0 // pred_check_branch
    %16 = sbr.rel (0) target = $region13
  $region12: #{gin_forward.7} parent=0 // pred_region
    _
  $region13: #{gin_forward.7} parent=0 // pred_fallthru
    _
  // Predicated region
  $region14: #{gin_forward.7} parent=0 // pred_check
    _
  $region15: #{gin_forward.7} parent=0 // pred_check_branch
    %18 = sbr.rel (0) target = $region17
  $region16: #{gin_forward.7} parent=0 // pred_region
    _
  $region17: #{gin_forward.7} parent=0 // pred_fallthru
    _
  // Predicated region
  $region18: #{gin_forward.7} parent=0 // pred_check
    _
  $region19: #{gin_forward.7} parent=0 // pred_check_branch
    %20 = sbr.rel (0) target = $region21
  $region20: #{gin_forward.7} parent=0 // pred_region
    _
  $region21: #{gin_forward.7} parent=0 // pred_fallthru
    _
  // Predicated region
  $region22: #{gin_forward.7} parent=0 // pred_check
    _
  $region23: #{gin_forward.7} parent=0 // pred_check_branch
    %22 = sbr.rel (0) target = $region25
  $region24: #{gin_forward.7} parent=0 // pred_region
    _
  $region25: #{gin_forward.7} parent=0 // pred_fallthru
    _
  %p24 = scmp.eq.s32.totalorder 0, 0
  // Predicated region
  $region26: #{gin_forward.7} parent=0 // pred_check
    %p25 = pneg %p24
  $region27: #{gin_forward.7} parent=0 // pred_check_branch
    %27 = sbr.rel (%p25) target = $region29
  $region28: #{gin_forward.7} parent=0 // pred_region
    %28 = vst [vmem:[#allocation2] sm:$0xff] 0.0
  $region29: #{gin_forward.7} parent=0 // pred_fallthru
    _
  %v29 = vld [vmem:[#allocation2] sm:$0xff]
  %v30 = vld [vmem:[%s0] sm:$0xf]
  %v31 = vld [vmem:[%s1] sm:$0xf]
  %v32 = vld [vmem:[%s1 + $0x4] sm:$0xf]
  %v33 = vld [vmem:[%s1 + $0x8] sm:$0xf]
  %v34 = vld [vmem:[%s1 + $0xc] sm:$0xf]
  %v35 = vld [vmem:[%s1 + $0x10] sm:$0xf]
  %v36 = vld [vmem:[%s1 + $0x14] sm:$0xf]
  %v37 = vld [vmem:[%s1 + $0x18] sm:$0xf]
  %v38 = vld [vmem:[%s1 + $0x1c] sm:$0xf]
  %v39 = vld [vmem:[%s1 + $0x20] sm:$0xf]
  %v40 = vld [vmem:[%s1 + $0x24] sm:$0xf]
  %v41 = vld [vmem:[%s1 + $0x28] sm:$0xf]
  %v42 = vld [vmem:[%s1 + $0x2c] sm:$0xf]
  %v43 = vld [vmem:[%s1 + $0x30] sm:$0xf]
  %v44 = vld [vmem:[%s1 + $0x34] sm:$0xf]
  %v45 = vld [vmem:[%s1 + $0x38] sm:$0xf]
  %v46 = vld [vmem:[%s1 + $0x3c] sm:$0xf]
  %v63 = vunpack.c.l.b16 %v31
  %v64 = vunpack.c.l.b16 %v32
  %v65 = vunpack.c.l.b16 %v33
  %v66 = vunpack.c.l.b16 %v34
  %v67 = vunpack.c.l.b16 %v35
  %v68 = vunpack.c.l.b16 %v36
  %v69 = vunpack.c.l.b16 %v37
  %v70 = vunpack.c.l.b16 %v38
  %v71 = vunpack.c.l.b16 %v39
  %v72 = vunpack.c.l.b16 %v40
  %v73 = vunpack.c.l.b16 %v41
  %v74 = vunpack.c.l.b16 %v42
  %v75 = vunpack.c.l.b16 %v43
  %v76 = vunpack.c.l.b16 %v44
  %v77 = vunpack.c.l.b16 %v45
  %v78 = vunpack.c.l.b16 %v46
  %v79 = vpack.c.b16 %v64, %v63
  %v80 = vpack.c.b16 %v66, %v65
  %v81 = vpack.c.b16 %v68, %v67
  %v82 = vpack.c.b16 %v70, %v69
  %v83 = vpack.c.b16 %v72, %v71
  %v84 = vpack.c.b16 %v74, %v73
  %v85 = vpack.c.b16 %v76, %v75
  %v86 = vpack.c.b16 %v78, %v77
  %95 = vmatprep.subr.bf16.mxu0 0
  %96 = vmatpush1.bf16.msra.mxu0 %v79
  %97 = vmatprep.subr.bf16.mxu0 0
  %98 = vmatpush1.bf16.msra.mxu0 %v80
  %99 = vmatprep.subr.bf16.mxu0 0
  %100 = vmatpush1.bf16.msra.mxu0 %v81
  %101 = vmatprep.subr.bf16.mxu0 0
  %102 = vmatpush1.bf16.msra.mxu0 %v82
  %103 = vmatprep.subr.bf16.mxu0 0
  %104 = vmatpush1.bf16.msra.mxu0 %v83
  %105 = vmatprep.subr.bf16.mxu0 0
  %106 = vmatpush1.bf16.msra.mxu0 %v84
  %107 = vmatprep.subr.bf16.mxu0 0
  %108 = vmatpush1.bf16.msra.mxu0 %v85
  %109 = vmatprep.subr.bf16.mxu0 0
  %110 = vmatpush1.bf16.msra.mxu0 %v86
  %111 = vmatprep.subr.bf16.mxu0 0
  %112 = vmatpush1.bf16.msra.mxu0 0
  %113 = vmatprep.subr.bf16.mxu0 0
  %114 = vmatpush1.bf16.msra.mxu0 0
  %115 = vmatprep.subr.bf16.mxu0 0
  %116 = vmatpush1.bf16.msra.mxu0 0
  %117 = vmatprep.subr.bf16.mxu0 0
  %118 = vmatpush1.bf16.msra.mxu0 0
  %119 = vmatprep.subr.bf16.mxu0 0
  %120 = vmatpush1.bf16.msra.mxu0 0
  %121 = vmatprep.subr.bf16.mxu0 0
  %122 = vmatpush1.bf16.msra.mxu0 0
  %123 = vmatprep.subr.bf16.mxu0 0
  %124 = vmatpush1.bf16.msra.mxu0 0
  %125 = vmatprep.subr.bf16.mxu0 0
  %126 = vmatpush1.bf16.msra.mxu0 0
  %127 = vmatprep.mubr.bf16.mxu0 0
  %128 = vmatmul.mubr.bf16.gmra.mrb[0].mxu0 %v30
  %v129 = vpop.f32.mrb[0].mxu0
  %v130 = vadd.f32 0.0, %v129
  %v131 = vpop.f32.mrb[0].mxu0
  %v132 = vpop.f32.mrb[0].mxu0
  %v133 = vpop.f32.mrb[0].mxu0
  %134 = vdwg.mxu0
  %v135 = vadd.f32 %v29, %v130
  %136 = vst [vmem:[#allocation2] sm:$0xff] %v135
  // Predicated region
  $region30: #{gin_forward.7} parent=0 // pred_check
    %p137 = pneg %p24
  $region31: #{gin_forward.7} parent=0 // pred_check_branch
    %139 = sbr.rel (%p137) target = $region33
  $region32: #{gin_forward.7} parent=0 // pred_region
    %v140 = vld [vmem:[#allocation2] sm:$0xff]
    %v141 = vpack.c.bf16 %v140, %v140
    %v142 = vld [vmem:[%s2] sm:$0xf]
    %v143 = vld [vmem:[%s2 + $0x4] sm:$0xf]
    %v144 = vld [vmem:[%s2 + $0x8] sm:$0xf]
    %v145 = vld [vmem:[%s2 + $0xc] sm:$0xf]
    %v146 = vld [vmem:[%s2 + $0x10] sm:$0xf]
    %v147 = vld [vmem:[%s2 + $0x14] sm:$0xf]
    %v148 = vld [vmem:[%s2 + $0x18] sm:$0xf]
    %v149 = vld [vmem:[%s2 + $0x1c] sm:$0xf]
    %v150 = vld [vmem:[%s2 + $0x20] sm:$0xf]
    %v151 = vld [vmem:[%s2 + $0x24] sm:$0xf]
    %v152 = vld [vmem:[%s2 + $0x28] sm:$0xf]
    %v153 = vld [vmem:[%s2 + $0x2c] sm:$0xf]
    %v154 = vld [vmem:[%s2 + $0x30] sm:$0xf]
    %v155 = vld [vmem:[%s2 + $0x34] sm:$0xf]
    %v156 = vld [vmem:[%s2 + $0x38] sm:$0xf]
    %v157 = vld [vmem:[%s2 + $0x3c] sm:$0xf]
    %v158 = vld [vmem:[%s3] sm:$0x1]
    %v160 = vlaneseq
    %v161 = vshrl.u32 %v160, 7
    %v162 = vsub.s32 0, %v161
    %v163 = vrot.slane %v158, %v162
    %v181 = vunpack.c.l.b16 %v142
    %v182 = vunpack.c.l.b16 %v143
    %v183 = vunpack.c.l.b16 %v144
    %v184 = vunpack.c.l.b16 %v145
    %v185 = vunpack.c.l.b16 %v146
    %v186 = vunpack.c.l.b16 %v147
    %v187 = vunpack.c.l.b16 %v148
    %v188 = vunpack.c.l.b16 %v149
    %v189 = vunpack.c.l.b16 %v150
    %v190 = vunpack.c.l.b16 %v151
    %v191 = vunpack.c.l.b16 %v152
    %v192 = vunpack.c.l.b16 %v153
    %v193 = vunpack.c.l.b16 %v154
    %v194 = vunpack.c.l.b16 %v155
    %v195 = vunpack.c.l.b16 %v156
    %v196 = vunpack.c.l.b16 %v157
    %v197 = vpack.c.b16 %v182, %v181
    %v198 = vpack.c.b16 %v184, %v183
    %v199 = vpack.c.b16 %v186, %v185
    %v200 = vpack.c.b16 %v188, %v187
    %v201 = vpack.c.b16 %v190, %v189
    %v202 = vpack.c.b16 %v192, %v191
    %v203 = vpack.c.b16 %v194, %v193
    %v204 = vpack.c.b16 %v196, %v195
    %213 = vmatprep.subr.bf16.mxu0 0
    %214 = vmatpush1.bf16.msra.mxu0 %v197
    %215 = vmatprep.subr.bf16.mxu0 0
    %216 = vmatpush1.bf16.msra.mxu0 %v198
    %217 = vmatprep.subr.bf16.mxu0 0
    %218 = vmatpush1.bf16.msra.mxu0 %v199
    %219 = vmatprep.subr.bf16.mxu0 0
    %220 = vmatpush1.bf16.msra.mxu0 %v200
    %221 = vmatprep.subr.bf16.mxu0 0
    %222 = vmatpush1.bf16.msra.mxu0 %v201
    %223 = vmatprep.subr.bf16.mxu0 0
    %224 = vmatpush1.bf16.msra.mxu0 %v202
    %225 = vmatprep.subr.bf16.mxu0 0
    %226 = vmatpush1.bf16.msra.mxu0 %v203
    %227 = vmatprep.subr.bf16.mxu0 0
    %228 = vmatpush1.bf16.msra.mxu0 %v204
    %229 = vmatprep.subr.bf16.mxu0 0
    %230 = vmatpush1.bf16.msra.mxu0 0
    %231 = vmatprep.subr.bf16.mxu0 0
    %232 = vmatpush1.bf16.msra.mxu0 0
    %233 = vmatprep.subr.bf16.mxu0 0
    %234 = vmatpush1.bf16.msra.mxu0 0
    %235 = vmatprep.subr.bf16.mxu0 0
    %236 = vmatpush1.bf16.msra.mxu0 0
    %237 = vmatprep.subr.bf16.mxu0 0
    %238 = vmatpush1.bf16.msra.mxu0 0
    %239 = vmatprep.subr.bf16.mxu0 0
    %240 = vmatpush1.bf16.msra.mxu0 0
    %241 = vmatprep.subr.bf16.mxu0 0
    %242 = vmatpush1.bf16.msra.mxu0 0
    %243 = vmatprep.subr.bf16.mxu0 0
    %244 = vmatpush1.bf16.msra.mxu0 0
    %245 = vmatprep.mubr.bf16.mxu0 0
    %246 = vmatmul.mubr.bf16.gmra.mrb[0].mxu0 %v141
    %v247 = vpop.f32.mrb[0].mxu0
    %v248 = vadd.f32 %v163, %v247
    %v249 = vpop.f32.mrb[0].mxu0
    %v250 = vpop.f32.mrb[0].mxu0
    %v251 = vpop.f32.mrb[0].mxu0
    %252 = vdwg.mxu0
    %v253 = vmax.f32 %v248, 0.0
    %v254 = vpack.c.bf16 %v253, %v253
    %v255 = vld [vmem:[%s4] sm:$0xf]
    %v256 = vld [vmem:[%s4 + $0x4] sm:$0xf]
    %v257 = vld [vmem:[%s4 + $0x8] sm:$0xf]
    %v258 = vld [vmem:[%s4 + $0xc] sm:$0xf]
    %v259 = vld [vmem:[%s4 + $0x10] sm:$0xf]
    %v260 = vld [vmem:[%s4 + $0x14] sm:$0xf]
    %v261 = vld [vmem:[%s4 + $0x18] sm:$0xf]
    %v262 = vld [vmem:[%s4 + $0x1c] sm:$0xf]
    %v263 = vld [vmem:[%s4 + $0x20] sm:$0xf]
    %v264 = vld [vmem:[%s4 + $0x24] sm:$0xf]
    %v265 = vld [vmem:[%s4 + $0x28] sm:$0xf]
    %v266 = vld [vmem:[%s4 + $0x2c] sm:$0xf]
    %v267 = vld [vmem:[%s4 + $0x30] sm:$0xf]
    %v268 = vld [vmem:[%s4 + $0x34] sm:$0xf]
    %v269 = vld [vmem:[%s4 + $0x38] sm:$0xf]
    %v270 = vld [vmem:[%s4 + $0x3c] sm:$0xf]
    %v271 = vld [vmem:[%s5] sm:$0x1]
    %v273 = vlaneseq
    %v274 = vshrl.u32 %v273, 7
    %v275 = vsub.s32 0, %v274
    %v276 = vrot.slane %v271, %v275
    %v294 = vunpack.c.l.b16 %v255
    %v295 = vunpack.c.l.b16 %v256
    %v296 = vunpack.c.l.b16 %v257
    %v297 = vunpack.c.l.b16 %v258
    %v298 = vunpack.c.l.b16 %v259
    %v299 = vunpack.c.l.b16 %v260
    %v300 = vunpack.c.l.b16 %v261
    %v301 = vunpack.c.l.b16 %v262
    %v302 = vunpack.c.l.b16 %v263
    %v303 = vunpack.c.l.b16 %v264
    %v304 = vunpack.c.l.b16 %v265
    %v305 = vunpack.c.l.b16 %v266
    %v306 = vunpack.c.l.b16 %v267
    %v307 = vunpack.c.l.b16 %v268
    %v308 = vunpack.c.l.b16 %v269
    %v309 = vunpack.c.l.b16 %v270
    %v310 = vpack.c.b16 %v295, %v294
    %v311 = vpack.c.b16 %v297, %v296
    %v312 = vpack.c.b16 %v299, %v298
    %v313 = vpack.c.b16 %v301, %v300
    %v314 = vpack.c.b16 %v303, %v302
    %v315 = vpack.c.b16 %v305, %v304
    %v316 = vpack.c.b16 %v307, %v306
    %v317 = vpack.c.b16 %v309, %v308
    %326 = vmatprep.subr.bf16.mxu0 0
    %327 = vmatpush1.bf16.msra.mxu0 %v310
    %328 = vmatprep.subr.bf16.mxu0 0
    %329 = vmatpush1.bf16.msra.mxu0 %v311
    %330 = vmatprep.subr.bf16.mxu0 0
    %331 = vmatpush1.bf16.msra.mxu0 %v312
    %332 = vmatprep.subr.bf16.mxu0 0
    %333 = vmatpush1.bf16.msra.mxu0 %v313
    %334 = vmatprep.subr.bf16.mxu0 0
    %335 = vmatpush1.bf16.msra.mxu0 %v314
    %336 = vmatprep.subr.bf16.mxu0 0
    %337 = vmatpush1.bf16.msra.mxu0 %v315
    %338 = vmatprep.subr.bf16.mxu0 0
    %339 = vmatpush1.bf16.msra.mxu0 %v316
    %340 = vmatprep.subr.bf16.mxu0 0
    %341 = vmatpush1.bf16.msra.mxu0 %v317
    %342 = vmatprep.subr.bf16.mxu0 0
    %343 = vmatpush1.bf16.msra.mxu0 0
    %344 = vmatprep.subr.bf16.mxu0 0
    %345 = vmatpush1.bf16.msra.mxu0 0
    %346 = vmatprep.subr.bf16.mxu0 0
    %347 = vmatpush1.bf16.msra.mxu0 0
    %348 = vmatprep.subr.bf16.mxu0 0
    %349 = vmatpush1.bf16.msra.mxu0 0
    %350 = vmatprep.subr.bf16.mxu0 0
    %351 = vmatpush1.bf16.msra.mxu0 0
    %352 = vmatprep.subr.bf16.mxu0 0
    %353 = vmatpush1.bf16.msra.mxu0 0
    %354 = vmatprep.subr.bf16.mxu0 0
    %355 = vmatpush1.bf16.msra.mxu0 0
    %356 = vmatprep.subr.bf16.mxu0 0
    %357 = vmatpush1.bf16.msra.mxu0 0
    %358 = vmatprep.mubr.bf16.mxu0 0
    %359 = vmatmul.mubr.bf16.gmra.mrb[0].mxu0 %v254
    %v360 = vpop.f32.mrb[0].mxu0
    %v361 = vadd.f32 %v276, %v360
    %v362 = vpop.f32.mrb[0].mxu0
    %v363 = vpop.f32.mrb[0].mxu0
    %v364 = vpop.f32.mrb[0].mxu0
    %365 = vdwg.mxu0
    %366 = vst [vmem:[%s6] sm:$0xff] %v361
  $region33: #{gin_forward.7} parent=0 // pred_fallthru
    _
  // Predicated region
  $region34: #{gin_forward.7} parent=0 // pred_check
    _
  $region35: #{gin_forward.7} parent=0 // pred_check_branch
    %368 = sbr.rel (0) target = $region37
  $region36: #{gin_forward.7} parent=0 // pred_region
    _
  $region37: #{gin_forward.7} parent=0 // pred_fallthru
    _
  // Predicated region
  $region38: #{gin_forward.7} parent=0 // pred_check
    _
  $region39: #{gin_forward.7} parent=0 // pred_check_branch
    %370 = sbr.rel (0) target = $region41
  $region40: #{gin_forward.7} parent=0 // pred_region
    _
  $region41: #{gin_forward.7} parent=0 // pred_fallthru
    _

</llo_original>
